<compile_context>
chip_gen: v5e
topology: v5e:2x2
jax: 0.10.0
libtpu: 0.0.40
codegen_flags: <defaults>
</compile_context>

<pallas_src>
import jax
import jax.numpy as jnp
from jax import lax
from jax.experimental import pallas as pl
from jax.experimental.pallas import tpu as pltpu


# ----------------------------------------------------------------------------
# Fused kernel: patch-embed -> LayerNorm -> 1x1 conv -> separable bilinear up.
# grid = (batch, output_row_tile); front end cached in scratch per batch.
# ----------------------------------------------------------------------------
def fused_seg_kernel(p_ref, wp_ref, bp_ref, w1_ref, awf_ref, ahf_ref, b1_ref,
                     o_ref, scaled_sc):
    @pl.when(pl.program_id(1) == 0)
    def _():
        # patch embedding: Conv2d(3, C, kernel=14, stride=14) as bf16 matmul
        tok = jnp.dot(p_ref[0], wp_ref[...],
                      preferred_element_type=jnp.float32) + bp_ref[...]   # (P, C) f32

        # DINOv2 final LayerNorm over C (affine folded into w1/b1), eps = 1e-6
        mu = jnp.mean(tok, axis=-1, keepdims=True)
        var = jnp.mean((tok - mu) ** 2, axis=-1, keepdims=True)
        xn = (tok - mu) * lax.rsqrt(var + 1e-6)                           # (P, C) f32

        # 1x1 conv (out_channels=1): VPU multiply + lane reduce (MXU stays free)
        logits = (jnp.sum(xn * w1_ref[...], axis=-1, keepdims=True)
                  + b1_ref[0])                                            # (P, 1)

        # first half of the separable bilinear upsample, lane-dense, cached
        scaled_sc[...] = (logits * awf_ref[...]).astype(jnp.bfloat16)     # (P, 224)

    # second half: (row_tile, P) @ (P, 224) on the MXU, one output-row tile
    o_ref[0] = jnp.dot(ahf_ref[...], scaled_sc[...],
                       preferred_element_type=jnp.float32)


def seg_forward(patches, w_patch, b_patch, w1_row, aw_flat, ah_flat, b1, *,
                row_tile):
    B, P, D = patches.shape
    C = w_patch.shape[1]
    OUT = aw_flat.shape[1]
    n_row = OUT // row_tile

    flops = B * (2 * P * D * C + 6 * P * C + 2 * OUT * P * OUT)
    bytes_accessed = (B * P * D * 2 + D * C * 2 + 2 * C * 4 + 4
                      + 2 * (P * OUT) * 2 + B * OUT * OUT * 4)

    return pl.pallas_call(
        fused_seg_kernel,
        out_shape=jax.ShapeDtypeStruct((B, OUT, OUT), jnp.float32),
        grid=(B, n_row),
        in_specs=[
            pl.BlockSpec((1, P, D), lambda b, r: (b, 0, 0)),      # per-batch patches
            pl.BlockSpec((D, C), lambda b, r: (0, 0)),            # patch-embed W
            pl.BlockSpec((1, C), lambda b, r: (0, 0)),            # patch-embed bias
            pl.BlockSpec((1, C), lambda b, r: (0, 0)),            # folded 1x1 conv W
            pl.BlockSpec((P, OUT), lambda b, r: (0, 0)),          # AW_flat
            pl.BlockSpec((row_tile, P), lambda b, r: (r, 0)),     # AH_flat row tile
            pl.BlockSpec(memory_space=pltpu.MemorySpace.SMEM),    # conv bias scalar
        ],
        out_specs=pl.BlockSpec((1, row_tile, OUT), lambda b, r: (b, r, 0)),
        scratch_shapes=[pltpu.VMEM((P, OUT), jnp.bfloat16)],
        compiler_params=pltpu.CompilerParams(
            dimension_semantics=("parallel", "arbitrary")),
        cost_estimate=pl.CostEstimate(flops=flops, transcendentals=B * P,
                                      bytes_accessed=bytes_accessed),
    )(patches, w_patch, b_patch, w1_row, aw_flat, ah_flat, b1)


# ----------------------------------------------------------------------------
# Glue: bilinear interpolation matrix matching F.interpolate(mode='bilinear',
# align_corners=False); src clamped on both sides so weights stay valid for
# any in/out size ratio.
# ----------------------------------------------------------------------------
def bilinear_matrix(out_size, in_size):
    scale = in_size / out_size
    dst = jnp.arange(out_size, dtype=jnp.float32)
    src = (dst + 0.5) * scale - 0.5
    src = jnp.clip(src, 0.0, float(in_size - 1))
    i0 = jnp.floor(src).astype(jnp.int32)
    i1 = jnp.clip(i0 + 1, 0, in_size - 1)
    t = src - i0.astype(jnp.float32)
    A = (jax.nn.one_hot(i0, in_size, dtype=jnp.float32) * (1.0 - t)[:, None]
         + jax.nn.one_hot(i1, in_size, dtype=jnp.float32) * t[:, None])
    return A  # (out_size, in_size)


def my_segmentation_model(x, params):
    """Forward pass. x: NCHW float32 [B, 3, 224, 224] -> [B, 1, 224, 224]."""
    B, IN_C, IMG, _ = x.shape
    w_patch = params["w_patch"]                 # (D, C), D = IN_C * patch^2
    D, C = w_patch.shape
    PATCH = int(round((D // IN_C) ** 0.5))
    S = IMG // PATCH
    P = S * S
    OUT = 224
    ROW_TILE = 112                              # 2 output-row tiles per batch

    # im2col patchify (Conv2d weight flatten order: C_in, kh, kw), fused with
    # the bf16 cast into a single wrapper copy.  No K-pad (full-extent K=588).
    patches = x.reshape(B, IN_C, S, PATCH, S, PATCH)
    patches = patches.transpose(0, 2, 4, 1, 3, 5).reshape(B, P, D)
    patches = patches.astype(jnp.bfloat16)

    w_patch_bf = w_patch.astype(jnp.bfloat16)
    b_patch = params["b_patch"].astype(jnp.float32)            # (1, C)

    # fold LayerNorm affine into the 1x1 conv: w1' = gamma*w1, b1' = sum(beta*w1)+b1
    w1_row = (params["gamma"] * params["w1"]).reshape(1, C).astype(jnp.float32)
    b1 = (jnp.sum(params["beta"] * params["w1"]) + params["b1"]).reshape(1)
    b1 = b1.astype(jnp.float32)

    # exact bilinear interp matrices, flattened over the token axis p = r*S + c:
    #   AH_flat[i, r*S+c] = ah[i, r]     AW_flat[r*S+c, j] = awt[c, j]
    ah = bilinear_matrix(OUT, S)                 # (224, S)
    awt = bilinear_matrix(OUT, S).T              # (S, 224)
    ah_flat = jnp.repeat(ah, S, axis=1).astype(jnp.bfloat16)   # (224, P)
    aw_flat = jnp.tile(awt, (S, 1)).astype(jnp.bfloat16)       # (P, 224)

    out = seg_forward(patches, w_patch_bf, b_patch, w1_row, aw_flat, ah_flat,
                      b1, row_tile=ROW_TILE)             # (B, 224, 224)
    return out[:, None, :, :]                            # NCHW (B, 1, 224, 224)


if __name__ == "__main__":
    B, IN_C, IMG, PATCH, EMBED = 2, 3, 224, 14, 32
    D = IN_C * PATCH * PATCH

    key = jax.random.PRNGKey(0)
    kx, kw, kb, kw1, kb1 = jax.random.split(key, 5)

    x = jax.random.normal(kx, (B, IN_C, IMG, IMG), dtype=jnp.float32)

    params = {
        # patch-embed conv weight [C_out=EMBED, C_in*k*k] transposed to [D, EMBED]
        "w_patch": jax.random.normal(kw, (D, EMBED), dtype=jnp.float32) * 0.02,
        "b_patch": jax.random.normal(kb, (1, EMBED), dtype=jnp.float32) * 0.02,
        # final LayerNorm (x_norm) affine params
        "gamma": jnp.ones((EMBED,), jnp.float32),
        "beta": jnp.zeros((EMBED,), jnp.float32),
        # linear1 = Conv2d(EMBED, 1, kernel_size=1): weight (C,), bias scalar
        "w1": jax.random.normal(kw1, (EMBED,), dtype=jnp.float32) * 0.1,
        "b1": jax.random.normal(kb1, (), dtype=jnp.float32) * 0.1,
    }

    fwd = jax.jit(my_segmentation_model)
    out = fwd(x, params)
    jax.block_until_ready(out)
    assert out.shape == (B, 1, 224, 224), out.shape
    assert bool(jnp.all(jnp.isfinite(out)))
    print("KERNEL_OK")
</pallas_src>

<mosaic_0001>
module attributes {stable_mosaic.version = 11 : i64} {
  func.func @fused_seg_kernel(%arg0: i32, %arg1: i32, %arg2: memref<1x256x588xbf16, #tpu.memory_space<vmem>>, %arg3: memref<588x32xbf16, #tpu.memory_space<vmem>>, %arg4: memref<1x32xf32, #tpu.memory_space<vmem>>, %arg5: memref<1x32xf32, #tpu.memory_space<vmem>>, %arg6: memref<256x224xbf16, #tpu.memory_space<vmem>>, %arg7: memref<112x256xbf16, #tpu.memory_space<vmem>>, %arg8: memref<1xf32, #tpu.memory_space<smem>>, %arg9: memref<1x112x224xf32, #tpu.memory_space<vmem>>, %arg10: memref<256x224xbf16, #tpu.memory_space<vmem>>) attributes {dimension_semantics = [#tpu.dimension_semantics<parallel>, #tpu.dimension_semantics<arbitrary>], iteration_bounds = array<i64: 2, 2>, scalar_prefetch = 0 : i64, scratch_operands = 1 : i64, tpu.core_type = #tpu.core_type<tc>, window_params = [{transform_indices = @transform_0, window_bounds = array<i64: 1, 256, 588>}, {pipeline_mode = #tpu.pipeline_mode<synchronous>, transform_indices = @transform_1, window_bounds = array<i64: 588, 32>}, {pipeline_mode = #tpu.pipeline_mode<synchronous>, transform_indices = @transform_2, window_bounds = array<i64: 1, 32>}, {pipeline_mode = #tpu.pipeline_mode<synchronous>, transform_indices = @transform_3, window_bounds = array<i64: 1, 32>}, {pipeline_mode = #tpu.pipeline_mode<synchronous>, transform_indices = @transform_4, window_bounds = array<i64: 256, 224>}, {transform_indices = @transform_5, window_bounds = array<i64: 112, 256>}, {transform_indices = @transform_6, window_bounds = array<i64: 1>}, {transform_indices = @transform_7, window_bounds = array<i64: 1, 112, 224>}]} {
    %c0_i32 = arith.constant 0 : i32
    %0 = arith.cmpi eq, %arg1, %c0_i32 : i32
    %1 = arith.extui %0 : i1 to i32
    %c0_i32_0 = arith.constant 0 : i32
    %2 = arith.cmpi ne, %1, %c0_i32_0 : i32
    scf.if %2 {
      %c0_7 = arith.constant 0 : index
      %c0_8 = arith.constant 0 : index
      %c0_9 = arith.constant 0 : index
      %9 = vector.load %arg2[%c0_7, %c0_8, %c0_9] : memref<1x256x588xbf16, #tpu.memory_space<vmem>>, vector<1x256x588xbf16>
      %10 = vector.shape_cast %9 : vector<1x256x588xbf16> to vector<256x588xbf16>
      %c0_10 = arith.constant 0 : index
      %c0_11 = arith.constant 0 : index
      %11 = vector.load %arg3[%c0_10, %c0_11] : memref<588x32xbf16, #tpu.memory_space<vmem>>, vector<588x32xbf16>
      %cst_12 = arith.constant dense<0.000000e+00> : vector<256x32xf32>
      %12 = tpu.matmul %10, %11, %cst_12 {dimension_numbers = #tpu.dot_dimension_numbers<[1], [0], [0], [1], [0, 0, 1, 1], [], []>} : vector<256x588xbf16>, vector<588x32xbf16>, vector<256x32xf32> -> vector<256x32xf32>
      %c0_13 = arith.constant 0 : index
      %c0_14 = arith.constant 0 : index
      %13 = vector.load %arg4[%c0_13, %c0_14] : memref<1x32xf32, #tpu.memory_space<vmem>>, vector<1x32xf32>
      %14 = vector.broadcast %13 : vector<1x32xf32> to vector<256x32xf32>
      %15 = arith.addf %12, %14 : vector<256x32xf32>
      %cst_15 = arith.constant dense<0.000000e+00> : vector<256xf32>
      %16 = vector.multi_reduction <add>, %15, %cst_15 [1] : vector<256x32xf32> to vector<256xf32>
      %17 = vector.shape_cast %16 : vector<256xf32> to vector<256x1xf32>
      %cst_16 = arith.constant 3.200000e+01 : f32
      %18 = vector.broadcast %cst_16 : f32 to vector<256x1xf32>
      %19 = arith.divf %17, %18 : vector<256x1xf32>
      %20 = vector.broadcast %19 : vector<256x1xf32> to vector<256x32xf32>
      %21 = arith.subf %15, %20 : vector<256x32xf32>
      %22 = arith.mulf %21, %21 : vector<256x32xf32>
      %cst_17 = arith.constant dense<0.000000e+00> : vector<256xf32>
      %23 = vector.multi_reduction <add>, %22, %cst_17 [1] : vector<256x32xf32> to vector<256xf32>
      %24 = vector.shape_cast %23 : vector<256xf32> to vector<256x1xf32>
      %cst_18 = arith.constant 3.200000e+01 : f32
      %25 = vector.broadcast %cst_18 : f32 to vector<256x1xf32>
      %26 = arith.divf %24, %25 : vector<256x1xf32>
      %27 = vector.broadcast %19 : vector<256x1xf32> to vector<256x32xf32>
      %28 = arith.subf %15, %27 : vector<256x32xf32>
      %cst_19 = arith.constant 9.99999997E-7 : f32
      %29 = vector.broadcast %cst_19 : f32 to vector<256x1xf32>
      %30 = arith.addf %26, %29 : vector<256x1xf32>
      %31 = math.rsqrt %30 : vector<256x1xf32>
      %32 = vector.broadcast %31 : vector<256x1xf32> to vector<256x32xf32>
      %33 = arith.mulf %28, %32 : vector<256x32xf32>
      %c0_20 = arith.constant 0 : index
      %c0_21 = arith.constant 0 : index
      %34 = vector.load %arg5[%c0_20, %c0_21] : memref<1x32xf32, #tpu.memory_space<vmem>>, vector<1x32xf32>
      %35 = vector.broadcast %34 : vector<1x32xf32> to vector<256x32xf32>
      %36 = arith.mulf %33, %35 : vector<256x32xf32>
      %cst_22 = arith.constant dense<0.000000e+00> : vector<256xf32>
      %37 = vector.multi_reduction <add>, %36, %cst_22 [1] : vector<256x32xf32> to vector<256xf32>
      %38 = vector.shape_cast %37 : vector<256xf32> to vector<256x1xf32>
      %c0_23 = arith.constant 0 : index
      %39 = memref.load %arg8[%c0_23] : memref<1xf32, #tpu.memory_space<smem>>
      %40 = vector.broadcast %39 : f32 to vector<256x1xf32>
      %41 = arith.addf %38, %40 : vector<256x1xf32>
      %c0_24 = arith.constant 0 : index
      %c0_25 = arith.constant 0 : index
      %42 = vector.load %arg6[%c0_24, %c0_25] : memref<256x224xbf16, #tpu.memory_space<vmem>>, vector<256x224xbf16>
      %43 = arith.extf %42 : vector<256x224xbf16> to vector<256x224xf32>
      %44 = vector.broadcast %41 : vector<256x1xf32> to vector<256x224xf32>
      %45 = arith.mulf %44, %43 : vector<256x224xf32>
      %46 = arith.truncf %45 : vector<256x224xf32> to vector<256x224xbf16>
      %c0_26 = arith.constant 0 : index
      %c0_27 = arith.constant 0 : index
      %47 = vector.load %arg10[%c0_26, %c0_27] : memref<256x224xbf16, #tpu.memory_space<vmem>>, vector<256x224xbf16>
      tpu.vector_store %arg10[%c0_26, %c0_27], %46 {strides = array<i32>} : memref<256x224xbf16, #tpu.memory_space<vmem>>, vector<256x224xbf16>,
    } else {
    }
    %c0 = arith.constant 0 : index
    %c0_1 = arith.constant 0 : index
    %3 = vector.load %arg7[%c0, %c0_1] : memref<112x256xbf16, #tpu.memory_space<vmem>>, vector<112x256xbf16>
    %c0_2 = arith.constant 0 : index
    %c0_3 = arith.constant 0 : index
    %4 = vector.load %arg10[%c0_2, %c0_3] : memref<256x224xbf16, #tpu.memory_space<vmem>>, vector<256x224xbf16>
    %cst = arith.constant dense<0.000000e+00> : vector<112x224xf32>
    %5 = tpu.matmul %3, %4, %cst {dimension_numbers = #tpu.dot_dimension_numbers<[1], [0], [0], [1], [0, 0, 1, 1], [], []>} : vector<112x256xbf16>, vector<256x224xbf16>, vector<112x224xf32> -> vector<112x224xf32>
    %c0_4 = arith.constant 0 : index
    %c0_5 = arith.constant 0 : index
    %c0_6 = arith.constant 0 : index
    %6 = vector.load %arg9[%c0_4, %c0_5, %c0_6] : memref<1x112x224xf32, #tpu.memory_space<vmem>>, vector<1x112x224xf32>
    %7 = vector.shape_cast %6 : vector<1x112x224xf32> to vector<112x224xf32>
    %8 = vector.shape_cast %5 : vector<112x224xf32> to vector<1x112x224xf32>
    tpu.vector_store %arg9[%c0_4, %c0_5, %c0_6], %8 {strides = array<i32>} : memref<1x112x224xf32, #tpu.memory_space<vmem>>, vector<1x112x224xf32>,
    return
  }
  func.func @transform_0(%arg0: i32, %arg1: i32) -> (i32, i32, i32) {
    %c0_i32 = arith.constant 0 : i32
    %c0_i32_0 = arith.constant 0 : i32
    %c0_i32_1 = arith.constant 0 : i32
    return %arg0, %c0_i32, %c0_i32_0 : i32, i32, i32
  }
  func.func @transform_1(%arg0: i32, %arg1: i32) -> (i32, i32) {
    %c0_i32 = arith.constant 0 : i32
    %c0_i32_0 = arith.constant 0 : i32
    %c0_i32_1 = arith.constant 0 : i32
    return %c0_i32, %c0_i32_0 : i32, i32
  }
  func.func @transform_2(%arg0: i32, %arg1: i32) -> (i32, i32) {
    %c0_i32 = arith.constant 0 : i32
    %c0_i32_0 = arith.constant 0 : i32
    %c0_i32_1 = arith.constant 0 : i32
    return %c0_i32, %c0_i32_0 : i32, i32
  }
  func.func @transform_3(%arg0: i32, %arg1: i32) -> (i32, i32) {
    %c0_i32 = arith.constant 0 : i32
    %c0_i32_0 = arith.constant 0 : i32
    %c0_i32_1 = arith.constant 0 : i32
    return %c0_i32, %c0_i32_0 : i32, i32
  }
  func.func @transform_4(%arg0: i32, %arg1: i32) -> (i32, i32) {
    %c0_i32 = arith.constant 0 : i32
    %c0_i32_0 = arith.constant 0 : i32
    %c0_i32_1 = arith.constant 0 : i32
    return %c0_i32, %c0_i32_0 : i32, i32
  }
  func.func @transform_5(%arg0: i32, %arg1: i32) -> (i32, i32) {
    %c0_i32 = arith.constant 0 : i32
    %c0_i32_0 = arith.constant 0 : i32
    return %arg1, %c0_i32 : i32, i32
  }
  func.func @transform_6(%arg0: i32, %arg1: i32) -> i32 {
    %c0_i32 = arith.constant 0 : i32
    %c0_i32_0 = arith.constant 0 : i32
    return %c0_i32 : i32
  }
  func.func @transform_7(%arg0: i32, %arg1: i32) -> (i32, i32, i32) {
    %c0_i32 = arith.constant 0 : i32
    %c0_i32_0 = arith.constant 0 : i32
    return %arg0, %arg1, %c0_i32 : i32, i32, i32
  }
}

</mosaic_0001>

<llo_original>
// kernel: my_segmentation_model.1
$region0: #{my_segmentation_model.1}
  #allocation0 [shape = 'u32[]', space=smem, size = 0x4, offset = 0x4, fixed_abs, tag = 'smem constant byte address 0x4 - core index']
  #allocation1 [shape = 'u32[72,128]{1,0:T(1,128)}', space=vmem, size = 0x9000, scoped, tag = 'internal scratch']
  #allocation2 [shape = 'bf16[256,224]{1,0:T(8,128)(2,1)}', space=vmem, size = 0x20000, scoped, tag = 'scratch operand']
  #allocation3 [shape = 'f32[1]{0:T(128)S(6)}', space=smem, size = 0x200, scoped, tag = 'scoped memory for my_segmentation_model.1']
  %s0 = inlined_call_operand.vmem [shape: bf16[2,256,588], index: 0, kind: input, shape index: {}]
  %s1 = inlined_call_operand.vmem [shape: bf16[588,32], index: 1, kind: input, shape index: {}]
  %s2 = inlined_call_operand.vmem [shape: f32[1,32], index: 2, kind: input, shape index: {}]
  %s3 = inlined_call_operand.vmem [shape: f32[1,32], index: 3, kind: input, shape index: {}]
  %s4 = inlined_call_operand.vmem [shape: bf16[256,224], index: 4, kind: input, shape index: {}]
  %s5 = inlined_call_operand.vmem [shape: bf16[224,256], index: 5, kind: input, shape index: {}]
  %s6 = inlined_call_operand.<no memory space> [shape: f32[1], index: 6, kind: input, shape index: {}]
  %s7 = inlined_call_operand.hbm [shape: f32[2,224,224], index: 7, kind: output, shape index: {}]
  %s8 = sld [smem:[#allocation0]]
  $region65: #{my_segmentation_model.1} parent=0
    _
  %s10 = ssub.s32 1, %s8
  %s11 = scalar_select 0, %s10, %s8
  %12 = sst [smem:[#allocation3]] %s6
  $region1: #{my_segmentation_model.1} parent=0
    #allocation4 [shape = 'u8[229376]{0}', space=vmem, size = 0x38000, scoped, tag = 'output window, operand 0']
    #allocation5 [shape = 's32[2]{0}', space=sflag, size = 0x8, scoped, tag = 'scoped memory for my_segmentation_model.1']
    %13 = vsyncpa [#allocation5], 0
    %s14 = scalar_lea.sflag [#allocation5], 1
    %15 = vsyncpa %s14, 0
    loop: start=0, step=1, limit=6
    $region2: #{my_segmentation_model.1} parent=1 // loop_pre_header
      _
    $region3: #{my_segmentation_model.1} parent=1 // loop_header
      %s17 = sphi 0, %s21
      %p18 = scmp.ge.s32.totalorder %s17, 6
      %s24 = sphi 0, %s36
      %s25 = sphi 0, %s32
      %s26 = sphi 0, %s24
      %s27 = sphi 0, %s25
      %s28 = sphi 0, %s26
      %s29 = sphi 0, %s27
      %s39 = sphi 0, %s41
      %s42 = sphi 0, %s39
      %s43 = sphi 0, %s42
      %s59 = sphi 0, %s43
      %s63 = sphi 0, %s63
      %s65 = sphi 0, %s63
      %s66 = sphi 0, %s65
      %s80 = sphi 0, %s66
      %s84 = sphi 0, %s84
      %s86 = sphi 0, %s84
      %s87 = sphi 0, %s86
      %s101 = sphi 0, %s87
      %s105 = sphi 0, %s105
      %s107 = sphi 0, %s105
      %s108 = sphi 0, %s107
      %s122 = sphi 0, %s108
      %s126 = sphi 0, %s126
      %s128 = sphi 0, %s126
      %s129 = sphi 0, %s128
      %s143 = sphi 0, %s129
      %s149 = sphi 0, %s151
      %s152 = sphi 0, %s149
      %s153 = sphi 0, %s152
      %s169 = sphi 0, %s153
      %s173 = sphi 0, %s173
      %s175 = sphi 0, %s173
      %s176 = sphi 0, %s175
      %s190 = sphi 0, %s176
      %s198 = sphi 0, %s200
      %s201 = sphi 0, %s198
      %s202 = sphi 0, %s201
      %s218 = sphi 0, %s202
    $region4: #{my_segmentation_model.1} parent=1 // loop_header_branch
      %20 = sbr.rel (%p18) target = $region8
    $region5: #{my_segmentation_model.1} parent=1 // loop_body
      %s22 = ssub.s32 %s17, 1
      %s23 = ssub.s32 %s17, 2
      %s30 = sadd.s32 1, %s25
      %p31 = scmp.ge.s32.totalorder %s30, 2
      %s32 = scalar_select %p31, 0, %s30
      %s33 = sadd.s32 1, %s24
      %s34 = scalar_select %p31, %s33, %s24
      %p35 = scmp.ge.s32.totalorder %s34, 2
      %s36 = scalar_select %p35, 0, %s34
      %s37 = ssub.s32 %s24, %s36
      %p38 = scmp.eq.s32.totalorder %s37, 0
      %s40 = sadd.s32 %s39, 1
      %s41 = scalar_select %p38, %s39, %s40
      %p44 = pneg %p38
      %p45 = scmp.eq.s32.totalorder %s17, 3
      %p46 = por %p44, %p45
      %p47 = scmp.ne.s32.totalorder %s39, %s42
      %p48 = scmp.eq.s32.totalorder %s17, 0
      %p49 = por %p47, %p48
      %p50 = scmp.ne.s32.totalorder %s39, %s42
      %p51 = scmp.eq.s32.totalorder %s22, 3
      %p52 = por %p50, %p51
      %p53 = scmp.ne.s32.totalorder %s42, %s43
      %p54 = scmp.eq.s32.totalorder %s22, 0
      %p55 = por %p53, %p54
      %p56 = scmp.ne.s32.totalorder %s42, %s43
      %p57 = scmp.eq.s32.totalorder %s23, 3
      %p58 = por %p56, %p57
      %p60 = scmp.ne.s32.totalorder %s43, %s59
      %p61 = scmp.eq.s32.totalorder %s23, 0
      %p62 = por %p60, %p61
      %s64 = sadd.s32 %s63, 1
      %p67 = scmp.eq.s32.totalorder %s17, 3
      %p68 = scmp.ne.s32.totalorder %s63, %s65
      %p69 = scmp.eq.s32.totalorder %s17, 0
      %p70 = por %p68, %p69
      %p71 = scmp.ne.s32.totalorder %s63, %s65
      %p72 = scmp.eq.s32.totalorder %s22, 3
      %p73 = por %p71, %p72
      %p74 = scmp.ne.s32.totalorder %s65, %s66
      %p75 = scmp.eq.s32.totalorder %s22, 0
      %p76 = por %p74, %p75
      %p77 = scmp.ne.s32.totalorder %s65, %s66
      %p78 = scmp.eq.s32.totalorder %s23, 3
      %p79 = por %p77, %p78
      %p81 = scmp.ne.s32.totalorder %s66, %s80
      %p82 = scmp.eq.s32.totalorder %s23, 0
      %p83 = por %p81, %p82
      %s85 = sadd.s32 %s84, 1
      %p88 = scmp.eq.s32.totalorder %s17, 3
      %p89 = scmp.ne.s32.totalorder %s84, %s86
      %p90 = scmp.eq.s32.totalorder %s17, 0
      %p91 = por %p89, %p90
      %p92 = scmp.ne.s32.totalorder %s84, %s86
      %p93 = scmp.eq.s32.totalorder %s22, 3
      %p94 = por %p92, %p93
      %p95 = scmp.ne.s32.totalorder %s86, %s87
      %p96 = scmp.eq.s32.totalorder %s22, 0
      %p97 = por %p95, %p96
      %p98 = scmp.ne.s32.totalorder %s86, %s87
      %p99 = scmp.eq.s32.totalorder %s23, 3
      %p100 = por %p98, %p99
      %p102 = scmp.ne.s32.totalorder %s87, %s101
      %p103 = scmp.eq.s32.totalorder %s23, 0
      %p104 = por %p102, %p103
      %s106 = sadd.s32 %s105, 1
      %p109 = scmp.eq.s32.totalorder %s17, 3
      %p110 = scmp.ne.s32.totalorder %s105, %s107
      %p111 = scmp.eq.s32.totalorder %s17, 0
      %p112 = por %p110, %p111
      %p113 = scmp.ne.s32.totalorder %s105, %s107
      %p114 = scmp.eq.s32.totalorder %s22, 3
      %p115 = por %p113, %p114
      %p116 = scmp.ne.s32.totalorder %s107, %s108
      %p117 = scmp.eq.s32.totalorder %s22, 0
      %p118 = por %p116, %p117
      %p119 = scmp.ne.s32.totalorder %s107, %s108
      %p120 = scmp.eq.s32.totalorder %s23, 3
      %p121 = por %p119, %p120
      %p123 = scmp.ne.s32.totalorder %s108, %s122
      %p124 = scmp.eq.s32.totalorder %s23, 0
      %p125 = por %p123, %p124
      %s127 = sadd.s32 %s126, 1
      %p130 = scmp.eq.s32.totalorder %s17, 3
      %p131 = scmp.ne.s32.totalorder %s126, %s128
      %p132 = scmp.eq.s32.totalorder %s17, 0
      %p133 = por %p131, %p132
      %p134 = scmp.ne.s32.totalorder %s126, %s128
      %p135 = scmp.eq.s32.totalorder %s22, 3
      %p136 = por %p134, %p135
      %p137 = scmp.ne.s32.totalorder %s128, %s129
      %p138 = scmp.eq.s32.totalorder %s22, 0
      %p139 = por %p137, %p138
      %p140 = scmp.ne.s32.totalorder %s128, %s129
      %p141 = scmp.eq.s32.totalorder %s23, 3
      %p142 = por %p140, %p141
      %p144 = scmp.ne.s32.totalorder %s129, %s143
      %p145 = scmp.eq.s32.totalorder %s23, 0
      %p146 = por %p144, %p145
      %s147 = ssub.s32 %s25, %s32
      %p148 = scmp.eq.s32.totalorder %s147, 0
      %s150 = sadd.s32 %s149, 1
      %s151 = scalar_select %p148, %s149, %s150
      %p154 = pneg %p148
      %p155 = scmp.eq.s32.totalorder %s17, 3
      %p156 = por %p154, %p155
      %p157 = scmp.ne.s32.totalorder %s149, %s152
      %p158 = scmp.eq.s32.totalorder %s17, 0
      %p159 = por %p157, %p158
      %p160 = scmp.ne.s32.totalorder %s149, %s152
      %p161 = scmp.eq.s32.totalorder %s22, 3
      %p162 = por %p160, %p161
      %p163 = scmp.ne.s32.totalorder %s152, %s153
      %p164 = scmp.eq.s32.totalorder %s22, 0
      %p165 = por %p163, %p164
      %p166 = scmp.ne.s32.totalorder %s152, %s153
      %p167 = scmp.eq.s32.totalorder %s23, 3
      %p168 = por %p166, %p167
      %p170 = scmp.ne.s32.totalorder %s153, %s169
      %p171 = scmp.eq.s32.totalorder %s23, 0
      %p172 = por %p170, %p171
      %s174 = sadd.s32 %s173, 1
      %p177 = scmp.eq.s32.totalorder %s17, 3
      %p178 = scmp.ne.s32.totalorder %s173, %s175
      %p179 = scmp.eq.s32.totalorder %s17, 0
      %p180 = por %p178, %p179
      %p181 = scmp.ne.s32.totalorder %s173, %s175
      %p182 = scmp.eq.s32.totalorder %s22, 3
      %p183 = por %p181, %p182
      %p184 = scmp.ne.s32.totalorder %s175, %s176
      %p185 = scmp.eq.s32.totalorder %s22, 0
      %p186 = por %p184, %p185
      %p187 = scmp.ne.s32.totalorder %s175, %s176
      %p188 = scmp.eq.s32.totalorder %s23, 3
      %p189 = por %p187, %p188
      %p191 = scmp.ne.s32.totalorder %s176, %s190
      %p192 = scmp.eq.s32.totalorder %s23, 0
      %p193 = por %p191, %p192
      %s194 = ssub.s32 %s24, %s36
      %s195 = ssub.s32 %s25, %s32
      %s196 = sor.u32 %s194, %s195
      %p197 = scmp.eq.s32.totalorder %s196, 0
      %s199 = sadd.s32 %s198, 1
      %s200 = scalar_select %p197, %s198, %s199
      %p203 = pneg %p197
      %p204 = scmp.eq.s32.totalorder %s17, 3
      %p205 = por %p203, %p204
      %p206 = scmp.ne.s32.totalorder %s198, %s201
      %p207 = scmp.eq.s32.totalorder %s17, 0
      %p208 = por %p206, %p207
      %p209 = scmp.ne.s32.totalorder %s198, %s201
      %p210 = scmp.eq.s32.totalorder %s22, 3
      %p211 = por %p209, %p210
      %p212 = scmp.ne.s32.totalorder %s201, %s202
      %p213 = scmp.eq.s32.totalorder %s22, 0
      %p214 = por %p212, %p213
      %p215 = scmp.ne.s32.totalorder %s201, %s202
      %p216 = scmp.eq.s32.totalorder %s23, 3
      %p217 = por %p215, %p216
      %p219 = scmp.ne.s32.totalorder %s202, %s218
      %p220 = scmp.eq.s32.totalorder %s23, 0
      %p221 = por %p219, %p220
      %p222 = scmp.le.s32.totalorder 1, %s17
      %p223 = scmp.lt.s32.totalorder %s17, 5
      %p224 = pnand %p222, %p223
      %p225 = pneg %p224
      // Predicated region
      $region9: #{my_segmentation_model.1} parent=5 // pred_check
        _
      $region10: #{my_segmentation_model.1} parent=5 // pred_check_branch
        %227 = sbr.rel (%p224) target = $region12
      $region11: #{my_segmentation_model.1} parent=5 // pred_region
        %s228 = ssub.s32 %s17, 1
        // Predicated region
        $region13: #{my_segmentation_model.1} parent=11 // pred_check
          %p229 = pneg %p76
        $region14: #{my_segmentation_model.1} parent=11 // pred_check_branch
          %231 = sbr.rel (%p229) target = $region16
        $region15: #{my_segmentation_model.1} parent=11 // pred_region
          _
        $region16: #{my_segmentation_model.1} parent=11 // pred_fallthru
          _
        // Predicated region
        $region17: #{my_segmentation_model.1} parent=11 // pred_check
          %p232 = pneg %p97
        $region18: #{my_segmentation_model.1} parent=11 // pred_check_branch
          %234 = sbr.rel (%p232) target = $region20
        $region19: #{my_segmentation_model.1} parent=11 // pred_region
          _
        $region20: #{my_segmentation_model.1} parent=11 // pred_fallthru
          _
        // Predicated region
        $region21: #{my_segmentation_model.1} parent=11 // pred_check
          %p235 = pneg %p118
        $region22: #{my_segmentation_model.1} parent=11 // pred_check_branch
          %237 = sbr.rel (%p235) target = $region24
        $region23: #{my_segmentation_model.1} parent=11 // pred_region
          _
        $region24: #{my_segmentation_model.1} parent=11 // pred_fallthru
          _
        // Predicated region
        $region25: #{my_segmentation_model.1} parent=11 // pred_check
          %p238 = pneg %p139
        $region26: #{my_segmentation_model.1} parent=11 // pred_check_branch
          %240 = sbr.rel (%p238) target = $region28
        $region27: #{my_segmentation_model.1} parent=11 // pred_region
          _
        $region28: #{my_segmentation_model.1} parent=11 // pred_fallthru
          _
        // Predicated region
        $region29: #{my_segmentation_model.1} parent=11 // pred_check
          %p241 = pneg %p186
        $region30: #{my_segmentation_model.1} parent=11 // pred_check_branch
          %243 = sbr.rel (%p241) target = $region32
        $region31: #{my_segmentation_model.1} parent=11 // pred_region
          _
        $region32: #{my_segmentation_model.1} parent=11 // pred_fallthru
          _
      $region12: #{my_segmentation_model.1} parent=5 // pred_fallthru
        _
      %p244 = scmp.lt.s32.totalorder %s17, 4
      // Predicated region
      $region33: #{my_segmentation_model.1} parent=5 // pred_check
        %p245 = pneg %p244
      $region34: #{my_segmentation_model.1} parent=5 // pred_check_branch
        %247 = sbr.rel (%p245) target = $region36
      $region35: #{my_segmentation_model.1} parent=5 // pred_region
        // Predicated region
        $region37: #{my_segmentation_model.1} parent=35 // pred_check
          %p248 = pneg %p49
        $region38: #{my_segmentation_model.1} parent=35 // pred_check_branch
          %250 = sbr.rel (%p248) target = $region40
        $region39: #{my_segmentation_model.1} parent=35 // pred_region
          %p251 = scmp.lt.s32.totalorder %s24, 1
          %s252 = scalar_select %p251, %s24, 1
          %s253 = smul.addr %s252, 160
          %s254 = smul.addr %s253, 4
          %s255 = scalar_lea.vmem %s0, %s254
        $region40: #{my_segmentation_model.1} parent=35 // pred_fallthru
          _
        // Predicated region
        $region41: #{my_segmentation_model.1} parent=35 // pred_check
          %p256 = pneg %p159
        $region42: #{my_segmentation_model.1} parent=35 // pred_check_branch
          %258 = sbr.rel (%p256) target = $region44
        $region43: #{my_segmentation_model.1} parent=35 // pred_region
          %s259 = smul.u32 14, %s25
          %p260 = scmp.lt.s32.totalorder %s259, 27
          %s261 = scalar_select %p260, %s259, 27
          %s262 = smul.addr %s261, 2
          %s263 = smul.addr %s262, 4
          %s264 = scalar_lea.vmem %s5, %s263
          %s265 = smul.u32 14, %s25
        $region44: #{my_segmentation_model.1} parent=35 // pred_fallthru
          _
      $region36: #{my_segmentation_model.1} parent=5 // pred_fallthru
        _
      %p266 = scmp.le.s32.totalorder 1, %s17
      %p267 = scmp.lt.s32.totalorder %s17, 5
      %p268 = pnand %p266, %p267
      %p269 = pneg %p268
      // Predicated region
      $region45: #{my_segmentation_model.1} parent=5 // pred_check
        _
      $region46: #{my_segmentation_model.1} parent=5 // pred_check_branch
        %271 = sbr.rel (%p268) target = $region48
      $region47: #{my_segmentation_model.1} parent=5 // pred_region
        %s272 = ssub.s32 %s17, 1
        %p273 = scmp.lt.s32.totalorder %s26, 1
        %s274 = scalar_select %p273, %s26, 1
        %s275 = smul.addr %s274, 160
        %s276 = smul.addr %s275, 4
        %s277 = scalar_lea.vmem %s0, %s276
        %p278 = pneg %p55
        %p279 = pneg %p52
        %p280 = pneg %p76
        %p281 = pneg %p73
        %p282 = pneg %p97
        %p283 = pneg %p94
        %p284 = pneg %p118
        %p285 = pneg %p115
        %p286 = pneg %p139
        %p287 = pneg %p136
        %s288 = smul.u32 14, %s27
        %p289 = scmp.lt.s32.totalorder %s288, 27
        %s290 = scalar_select %p289, %s288, 27
        %s291 = smul.addr %s290, 2
        %s292 = smul.addr %s291, 4
        %s293 = scalar_lea.vmem %s5, %s292
        %p294 = pneg %p165
        %p295 = pneg %p162
        %p296 = pneg %p186
        %p297 = pneg %p183
        %p298 = pneg %p214
        %p299 = pneg %p211
        %s300 = sand.u32 %s201, 1
        %s301 = scalar_lea.sflag [#allocation5], %s300
        %s302 = sand.u32 %s201, 1
        %s303 = smul.addr %s302, 224
        %s304 = scalar_lea.vmem [#allocation4], %s303
        %p305 = scmp.lt.s32.totalorder %s26, 1
        %s306 = scalar_select %p305, %s26, 1
        %s307 = smul.addr %s306, 160
        %s308 = smul.addr %s307, 4
        %s309 = scalar_lea.vmem %s0, %s308
        %s310 = smul.u32 14, %s27
        %p311 = scmp.lt.s32.totalorder %s310, 27
        %s312 = scalar_select %p311, %s310, 27
        %s313 = smul.addr %s312, 2
        %s314 = smul.addr %s313, 4
        %s315 = scalar_lea.vmem %s5, %s314
        %s316 = smul.u32 14, %s27
        %s317 = smul.u32 14, %s27
        %p319 = scmp.eq.s32.totalorder %s27, 0
        // Predicated region
        $region49: #{my_segmentation_model.1} parent=47 // pred_check
          %p320 = pneg %p319
        $region50: #{my_segmentation_model.1} parent=47 // pred_check_branch
          %322 = sbr.rel (%p320) target = $region52
        $region51: #{my_segmentation_model.1} parent=47 // pred_region
          %v323 = vld [vmem:[%s309] sm:$0xff]
          %v324 = vld [vmem:[%s309 + $0x8] sm:$0xff]
          %v325 = vld [vmem:[%s309 + $0x10] sm:$0xf]
          %v326 = vld [vmem:[%s309 + $0x14] sm:$0xff]
          %v327 = vld [vmem:[%s309 + $0x1c] sm:$0xff]
          %v328 = vld [vmem:[%s309 + $0x24] sm:$0xf]
          %v329 = vld [vmem:[%s309 + $0x28] sm:$0xff]
          %v330 = vld [vmem:[%s309 + $0x30] sm:$0xff]
          %v331 = vld [vmem:[%s309 + $0x38] sm:$0xf]
          %v332 = vld [vmem:[%s309 + $0x3c] sm:$0xff]
          %v333 = vld [vmem:[%s309 + $0x44] sm:$0xff]
          %v334 = vld [vmem:[%s309 + $0x4c] sm:$0xf]
          %v335 = vld [vmem:[%s309 + $0x50] sm:$0xff]
          %v336 = vld [vmem:[%s309 + $0x58] sm:$0xff]
          %v337 = vld [vmem:[%s309 + $0x60] sm:$0xf]
          %v338 = vld [vmem:[%s309 + $0x64] sm:$0xff]
          %v339 = vld [vmem:[%s309 + $0x6c] sm:$0xff]
          %v340 = vld [vmem:[%s309 + $0x74] sm:$0xf]
          %v341 = vld [vmem:[%s309 + $0x78] sm:$0xff]
          %v342 = vld [vmem:[%s309 + $0x80] sm:$0xff]
          %v343 = vld [vmem:[%s309 + $0x88] sm:$0xf]
          %v344 = vld [vmem:[%s309 + $0x8c] sm:$0xff]
          %v345 = vld [vmem:[%s309 + $0x94] sm:$0xff]
          %v346 = vld [vmem:[%s309 + $0x9c] sm:$0xf]
          %v347 = vld [vmem:[%s309 + $0xa0] sm:$0xff]
          %v348 = vld [vmem:[%s309 + $0xa8] sm:$0xff]
          %v349 = vld [vmem:[%s309 + $0xb0] sm:$0xf]
          %v350 = vld [vmem:[%s309 + $0xb4] sm:$0xff]
          %v351 = vld [vmem:[%s309 + $0xbc] sm:$0xff]
          %v352 = vld [vmem:[%s309 + $0xc4] sm:$0xf]
          %v353 = vld [vmem:[%s309 + $0xc8] sm:$0xff]
          %v354 = vld [vmem:[%s309 + $0xd0] sm:$0xff]
          %v355 = vld [vmem:[%s309 + $0xd8] sm:$0xf]
          %v356 = vld [vmem:[%s309 + $0xdc] sm:$0xff]
          %v357 = vld [vmem:[%s309 + $0xe4] sm:$0xff]
          %v358 = vld [vmem:[%s309 + $0xec] sm:$0xf]
          %v359 = vld [vmem:[%s309 + $0xf0] sm:$0xff]
          %v360 = vld [vmem:[%s309 + $0xf8] sm:$0xff]
          %v361 = vld [vmem:[%s309 + $0x100] sm:$0xf]
          %v362 = vld [vmem:[%s309 + $0x104] sm:$0xff]
          %v363 = vld [vmem:[%s309 + $0x10c] sm:$0xff]
          %v364 = vld [vmem:[%s309 + $0x114] sm:$0xf]
          %v365 = vld [vmem:[%s309 + $0x118] sm:$0xff]
          %v366 = vld [vmem:[%s309 + $0x120] sm:$0xff]
          %v367 = vld [vmem:[%s309 + $0x128] sm:$0xf]
          %v368 = vld [vmem:[%s309 + $0x12c] sm:$0xff]
          %v369 = vld [vmem:[%s309 + $0x134] sm:$0xff]
          %v370 = vld [vmem:[%s309 + $0x13c] sm:$0xf]
          %v371 = vld [vmem:[%s309 + $0x140] sm:$0xff]
          %v372 = vld [vmem:[%s309 + $0x148] sm:$0xff]
          %v373 = vld [vmem:[%s309 + $0x150] sm:$0xf]
          %v374 = vld [vmem:[%s309 + $0x154] sm:$0xff]
          %v375 = vld [vmem:[%s309 + $0x15c] sm:$0xff]
          %v376 = vld [vmem:[%s309 + $0x164] sm:$0xf]
          %v377 = vld [vmem:[%s309 + $0x168] sm:$0xff]
          %v378 = vld [vmem:[%s309 + $0x170] sm:$0xff]
          %v379 = vld [vmem:[%s309 + $0x178] sm:$0xf]
          %v380 = vld [vmem:[%s309 + $0x17c] sm:$0xff]
          %v381 = vld [vmem:[%s309 + $0x184] sm:$0xff]
          %v382 = vld [vmem:[%s309 + $0x18c] sm:$0xf]
          %v383 = vld [vmem:[%s309 + $0x190] sm:$0xff]
          %v384 = vld [vmem:[%s309 + $0x198] sm:$0xff]
          %v385 = vld [vmem:[%s309 + $0x1a0] sm:$0xf]
          %v386 = vld [vmem:[%s309 + $0x1a4] sm:$0xff]
          %v387 = vld [vmem:[%s309 + $0x1ac] sm:$0xff]
          %v388 = vld [vmem:[%s309 + $0x1b4] sm:$0xf]
          %v389 = vld [vmem:[%s309 + $0x1b8] sm:$0xff]
          %v390 = vld [vmem:[%s309 + $0x1c0] sm:$0xff]
          %v391 = vld [vmem:[%s309 + $0x1c8] sm:$0xf]
          %v392 = vld [vmem:[%s309 + $0x1cc] sm:$0xff]
          %v393 = vld [vmem:[%s309 + $0x1d4] sm:$0xff]
          %v394 = vld [vmem:[%s309 + $0x1dc] sm:$0xf]
          %v395 = vld [vmem:[%s309 + $0x1e0] sm:$0xff]
          %v396 = vld [vmem:[%s309 + $0x1e8] sm:$0xff]
          %v397 = vld [vmem:[%s309 + $0x1f0] sm:$0xf]
          %v398 = vld [vmem:[%s309 + $0x1f4] sm:$0xff]
          %v399 = vld [vmem:[%s309 + $0x1fc] sm:$0xff]
          %v400 = vld [vmem:[%s309 + $0x204] sm:$0xf]
          %v401 = vld [vmem:[%s309 + $0x208] sm:$0xff]
          %v402 = vld [vmem:[%s309 + $0x210] sm:$0xff]
          %v403 = vld [vmem:[%s309 + $0x218] sm:$0xf]
          %v404 = vld [vmem:[%s309 + $0x21c] sm:$0xff]
          %v405 = vld [vmem:[%s309 + $0x224] sm:$0xff]
          %v406 = vld [vmem:[%s309 + $0x22c] sm:$0xf]
          %v407 = vld [vmem:[%s309 + $0x230] sm:$0xff]
          %v408 = vld [vmem:[%s309 + $0x238] sm:$0xff]
          %v409 = vld [vmem:[%s309 + $0x240] sm:$0xf]
          %v410 = vld [vmem:[%s309 + $0x244] sm:$0xff]
          %v411 = vld [vmem:[%s309 + $0x24c] sm:$0xff]
          %v412 = vld [vmem:[%s309 + $0x254] sm:$0xf]
          %v413 = vld [vmem:[%s309 + $0x258] sm:$0xff]
          %v414 = vld [vmem:[%s309 + $0x260] sm:$0xff]
          %v415 = vld [vmem:[%s309 + $0x268] sm:$0xf]
          %v416 = vld [vmem:[%s309 + $0x26c] sm:$0xff]
          %v417 = vld [vmem:[%s309 + $0x274] sm:$0xff]
          %v418 = vld [vmem:[%s309 + $0x27c] sm:$0xf]
          %v419 = vld [vmem:[%s1] sm:$0xf]
          %v420 = vld [vmem:[%s1 + $0x4] sm:$0xf]
          %v421 = vld [vmem:[%s1 + $0x8] sm:$0xf]
          %v422 = vld [vmem:[%s1 + $0xc] sm:$0xf]
          %v423 = vld [vmem:[%s1 + $0x10] sm:$0xf]
          %v424 = vld [vmem:[%s1 + $0x14] sm:$0xf]
          %v425 = vld [vmem:[%s1 + $0x18] sm:$0xf]
          %v426 = vld [vmem:[%s1 + $0x1c] sm:$0xf]
          %v427 = vld [vmem:[%s1 + $0x20] sm:$0xf]
          %v428 = vld [vmem:[%s1 + $0x24] sm:$0xf]
          %v429 = vld [vmem:[%s1 + $0x28] sm:$0xf]
          %v430 = vld [vmem:[%s1 + $0x2c] sm:$0xf]
          %v431 = vld [vmem:[%s1 + $0x30] sm:$0xf]
          %v432 = vld [vmem:[%s1 + $0x34] sm:$0xf]
          %v433 = vld [vmem:[%s1 + $0x38] sm:$0xf]
          %v434 = vld [vmem:[%s1 + $0x3c] sm:$0xf]
          %v435 = vld [vmem:[%s1 + $0x40] sm:$0xf]
          %v436 = vld [vmem:[%s1 + $0x44] sm:$0xf]
          %v437 = vld [vmem:[%s1 + $0x48] sm:$0xf]
          %v438 = vld [vmem:[%s1 + $0x4c] sm:$0xf]
          %v439 = vld [vmem:[%s1 + $0x50] sm:$0xf]
          %v440 = vld [vmem:[%s1 + $0x54] sm:$0xf]
          %v441 = vld [vmem:[%s1 + $0x58] sm:$0xf]
          %v442 = vld [vmem:[%s1 + $0x5c] sm:$0xf]
          %v443 = vld [vmem:[%s1 + $0x60] sm:$0xf]
          %v444 = vld [vmem:[%s1 + $0x64] sm:$0xf]
          %v445 = vld [vmem:[%s1 + $0x68] sm:$0xf]
          %v446 = vld [vmem:[%s1 + $0x6c] sm:$0xf]
          %v447 = vld [vmem:[%s1 + $0x70] sm:$0xf]
          %v448 = vld [vmem:[%s1 + $0x74] sm:$0xf]
          %v449 = vld [vmem:[%s1 + $0x78] sm:$0xf]
          %v450 = vld [vmem:[%s1 + $0x7c] sm:$0xf]
          %v451 = vld [vmem:[%s1 + $0x80] sm:$0xf]
          %v452 = vld [vmem:[%s1 + $0x84] sm:$0xf]
          %v453 = vld [vmem:[%s1 + $0x88] sm:$0xf]
          %v454 = vld [vmem:[%s1 + $0x8c] sm:$0xf]
          %v455 = vld [vmem:[%s1 + $0x90] sm:$0xf]
          %v456 = vld [vmem:[%s1 + $0x94] sm:$0xf]
          %v457 = vld [vmem:[%s1 + $0x98] sm:$0xf]
          %v458 = vld [vmem:[%s1 + $0x9c] sm:$0xf]
          %v459 = vld [vmem:[%s1 + $0xa0] sm:$0xf]
          %v460 = vld [vmem:[%s1 + $0xa4] sm:$0xf]
          %v461 = vld [vmem:[%s1 + $0xa8] sm:$0xf]
          %v462 = vld [vmem:[%s1 + $0xac] sm:$0xf]
          %v463 = vld [vmem:[%s1 + $0xb0] sm:$0xf]
          %v464 = vld [vmem:[%s1 + $0xb4] sm:$0xf]
          %v465 = vld [vmem:[%s1 + $0xb8] sm:$0xf]
          %v466 = vld [vmem:[%s1 + $0xbc] sm:$0xf]
          %v467 = vld [vmem:[%s1 + $0xc0] sm:$0xf]
          %v468 = vld [vmem:[%s1 + $0xc4] sm:$0xf]
          %v469 = vld [vmem:[%s1 + $0xc8] sm:$0xf]
          %v470 = vld [vmem:[%s1 + $0xcc] sm:$0xf]
          %v471 = vld [vmem:[%s1 + $0xd0] sm:$0xf]
          %v472 = vld [vmem:[%s1 + $0xd4] sm:$0xf]
          %v473 = vld [vmem:[%s1 + $0xd8] sm:$0xf]
          %v474 = vld [vmem:[%s1 + $0xdc] sm:$0xf]
          %v475 = vld [vmem:[%s1 + $0xe0] sm:$0xf]
          %v476 = vld [vmem:[%s1 + $0xe4] sm:$0xf]
          %v477 = vld [vmem:[%s1 + $0xe8] sm:$0xf]
          %v478 = vld [vmem:[%s1 + $0xec] sm:$0xf]
          %v479 = vld [vmem:[%s1 + $0xf0] sm:$0xf]
          %v480 = vld [vmem:[%s1 + $0xf4] sm:$0xf]
          %v481 = vld [vmem:[%s1 + $0xf8] sm:$0xf]
          %v482 = vld [vmem:[%s1 + $0xfc] sm:$0xf]
          %v483 = vld [vmem:[%s1 + $0x100] sm:$0xf]
          %v484 = vld [vmem:[%s1 + $0x104] sm:$0xf]
          %v485 = vld [vmem:[%s1 + $0x108] sm:$0xf]
          %v486 = vld [vmem:[%s1 + $0x10c] sm:$0xf]
          %v487 = vld [vmem:[%s1 + $0x110] sm:$0xf]
          %v488 = vld [vmem:[%s1 + $0x114] sm:$0xf]
          %v489 = vld [vmem:[%s1 + $0x118] sm:$0xf]
          %v490 = vld [vmem:[%s1 + $0x11c] sm:$0xf]
          %v491 = vld [vmem:[%s1 + $0x120] sm:$0xf]
          %v492 = vld [vmem:[%s1 + $0x124] sm:$0x3]
          %v493 = vld [vmem:[%s2] sm:$0x1]
          %v495 = vperm.slane %v493, 0
          %v593 = vunpack.c.l.b16 %v323
          %v594 = vunpack.c.h.b16 %v323
          %v595 = vunpack.c.l.b16 %v324
          %v596 = vunpack.c.h.b16 %v324
          %v597 = vunpack.c.l.b16 %v325
          %v598 = vunpack.c.l.b16 %v326
          %v599 = vunpack.c.h.b16 %v326
          %v600 = vunpack.c.l.b16 %v327
          %v601 = vunpack.c.h.b16 %v327
          %v602 = vunpack.c.l.b16 %v328
          %v603 = vunpack.c.l.b16 %v329
          %v604 = vunpack.c.h.b16 %v329
          %v605 = vunpack.c.l.b16 %v330
          %v606 = vunpack.c.h.b16 %v330
          %v607 = vunpack.c.l.b16 %v331
          %v608 = vunpack.c.l.b16 %v332
          %v609 = vunpack.c.h.b16 %v332
          %v610 = vunpack.c.l.b16 %v333
          %v611 = vunpack.c.h.b16 %v333
          %v612 = vunpack.c.l.b16 %v334
          %v613 = vunpack.c.l.b16 %v335
          %v614 = vunpack.c.h.b16 %v335
          %v615 = vunpack.c.l.b16 %v336
          %v616 = vunpack.c.h.b16 %v336
          %v617 = vunpack.c.l.b16 %v337
          %v618 = vunpack.c.l.b16 %v338
          %v619 = vunpack.c.h.b16 %v338
          %v620 = vunpack.c.l.b16 %v339
          %v621 = vunpack.c.h.b16 %v339
          %v622 = vunpack.c.l.b16 %v340
          %v623 = vunpack.c.l.b16 %v341
          %v624 = vunpack.c.h.b16 %v341
          %v625 = vunpack.c.l.b16 %v342
          %v626 = vunpack.c.h.b16 %v342
          %v627 = vunpack.c.l.b16 %v343
          %v628 = vunpack.c.l.b16 %v344
          %v629 = vunpack.c.h.b16 %v344
          %v630 = vunpack.c.l.b16 %v345
          %v631 = vunpack.c.h.b16 %v345
          %v632 = vunpack.c.l.b16 %v346
          %v633 = vunpack.c.l.b16 %v347
          %v634 = vunpack.c.h.b16 %v347
          %v635 = vunpack.c.l.b16 %v348
          %v636 = vunpack.c.h.b16 %v348
          %v637 = vunpack.c.l.b16 %v349
          %v638 = vunpack.c.l.b16 %v350
          %v639 = vunpack.c.h.b16 %v350
          %v640 = vunpack.c.l.b16 %v351
          %v641 = vunpack.c.h.b16 %v351
          %v642 = vunpack.c.l.b16 %v352
          %v643 = vunpack.c.l.b16 %v353
          %v644 = vunpack.c.h.b16 %v353
          %v645 = vunpack.c.l.b16 %v354
          %v646 = vunpack.c.h.b16 %v354
          %v647 = vunpack.c.l.b16 %v355
          %v648 = vunpack.c.l.b16 %v356
          %v649 = vunpack.c.h.b16 %v356
          %v650 = vunpack.c.l.b16 %v357
          %v651 = vunpack.c.h.b16 %v357
          %v652 = vunpack.c.l.b16 %v358
          %v653 = vunpack.c.l.b16 %v359
          %v654 = vunpack.c.h.b16 %v359
          %v655 = vunpack.c.l.b16 %v360
          %v656 = vunpack.c.h.b16 %v360
          %v657 = vunpack.c.l.b16 %v361
          %v658 = vunpack.c.l.b16 %v362
          %v659 = vunpack.c.h.b16 %v362
          %v660 = vunpack.c.l.b16 %v363
          %v661 = vunpack.c.h.b16 %v363
          %v662 = vunpack.c.l.b16 %v364
          %v663 = vunpack.c.l.b16 %v365
          %v664 = vunpack.c.h.b16 %v365
          %v665 = vunpack.c.l.b16 %v366
          %v666 = vunpack.c.h.b16 %v366
          %v667 = vunpack.c.l.b16 %v367
          %v668 = vunpack.c.l.b16 %v368
          %v669 = vunpack.c.h.b16 %v368
          %v670 = vunpack.c.l.b16 %v369
          %v671 = vunpack.c.h.b16 %v369
          %v672 = vunpack.c.l.b16 %v370
          %v673 = vunpack.c.l.b16 %v371
          %v674 = vunpack.c.h.b16 %v371
          %v675 = vunpack.c.l.b16 %v372
          %v676 = vunpack.c.h.b16 %v372
          %v677 = vunpack.c.l.b16 %v373
          %v678 = vunpack.c.l.b16 %v374
          %v679 = vunpack.c.h.b16 %v374
          %v680 = vunpack.c.l.b16 %v375
          %v681 = vunpack.c.h.b16 %v375
          %v682 = vunpack.c.l.b16 %v376
          %v683 = vunpack.c.l.b16 %v377
          %v684 = vunpack.c.h.b16 %v377
          %v685 = vunpack.c.l.b16 %v378
          %v686 = vunpack.c.h.b16 %v378
          %v687 = vunpack.c.l.b16 %v379
          %v688 = vunpack.c.l.b16 %v380
          %v689 = vunpack.c.h.b16 %v380
          %v690 = vunpack.c.l.b16 %v381
          %v691 = vunpack.c.h.b16 %v381
          %v692 = vunpack.c.l.b16 %v382
          %v693 = vunpack.c.l.b16 %v383
          %v694 = vunpack.c.h.b16 %v383
          %v695 = vunpack.c.l.b16 %v384
          %v696 = vunpack.c.h.b16 %v384
          %v697 = vunpack.c.l.b16 %v385
          %v698 = vunpack.c.l.b16 %v386
          %v699 = vunpack.c.h.b16 %v386
          %v700 = vunpack.c.l.b16 %v387
          %v701 = vunpack.c.h.b16 %v387
          %v702 = vunpack.c.l.b16 %v388
          %v703 = vunpack.c.l.b16 %v389
          %v704 = vunpack.c.h.b16 %v389
          %v705 = vunpack.c.l.b16 %v390
          %v706 = vunpack.c.h.b16 %v390
          %v707 = vunpack.c.l.b16 %v391
          %v708 = vunpack.c.l.b16 %v392
          %v709 = vunpack.c.h.b16 %v392
          %v710 = vunpack.c.l.b16 %v393
          %v711 = vunpack.c.h.b16 %v393
          %v712 = vunpack.c.l.b16 %v394
          %v713 = vunpack.c.l.b16 %v395
          %v714 = vunpack.c.h.b16 %v395
          %v715 = vunpack.c.l.b16 %v396
          %v716 = vunpack.c.h.b16 %v396
          %v717 = vunpack.c.l.b16 %v397
          %v718 = vunpack.c.l.b16 %v398
          %v719 = vunpack.c.h.b16 %v398
          %v720 = vunpack.c.l.b16 %v399
          %v721 = vunpack.c.h.b16 %v399
          %v722 = vunpack.c.l.b16 %v400
          %v723 = vunpack.c.l.b16 %v401
          %v724 = vunpack.c.h.b16 %v401
          %v725 = vunpack.c.l.b16 %v402
          %v726 = vunpack.c.h.b16 %v402
          %v727 = vunpack.c.l.b16 %v403
          %v728 = vunpack.c.l.b16 %v404
          %v729 = vunpack.c.h.b16 %v404
          %v730 = vunpack.c.l.b16 %v405
          %v731 = vunpack.c.h.b16 %v405
          %v732 = vunpack.c.l.b16 %v406
          %v733 = vunpack.c.l.b16 %v407
          %v734 = vunpack.c.h.b16 %v407
          %v735 = vunpack.c.l.b16 %v408
          %v736 = vunpack.c.h.b16 %v408
          %v737 = vunpack.c.l.b16 %v409
          %v738 = vunpack.c.l.b16 %v410
          %v739 = vunpack.c.h.b16 %v410
          %v740 = vunpack.c.l.b16 %v411
          %v741 = vunpack.c.h.b16 %v411
          %v742 = vunpack.c.l.b16 %v412
          %v743 = vunpack.c.l.b16 %v413
          %v744 = vunpack.c.h.b16 %v413
          %v745 = vunpack.c.l.b16 %v414
          %v746 = vunpack.c.h.b16 %v414
          %v747 = vunpack.c.l.b16 %v415
          %v748 = vunpack.c.l.b16 %v416
          %v749 = vunpack.c.h.b16 %v416
          %v750 = vunpack.c.l.b16 %v417
          %v751 = vunpack.c.h.b16 %v417
          %v752 = vunpack.c.l.b16 %v418
          %v753 = vpack.c.b16 %v598, %v593
          %v754 = vpack.c.b16 %v599, %v594
          %v755 = vpack.c.b16 %v600, %v595
          %v756 = vpack.c.b16 %v601, %v596
          %v757 = vpack.c.b16 %v602, %v597
          %v758 = vpack.c.b16 %v608, %v603
          %v759 = vpack.c.b16 %v609, %v604
          %v760 = vpack.c.b16 %v610, %v605
          %v761 = vpack.c.b16 %v611, %v606
          %v762 = vpack.c.b16 %v612, %v607
          %v763 = vpack.c.b16 %v618, %v613
          %v764 = vpack.c.b16 %v619, %v614
          %v765 = vpack.c.b16 %v620, %v615
          %v766 = vpack.c.b16 %v621, %v616
          %v767 = vpack.c.b16 %v622, %v617
          %v768 = vpack.c.b16 %v628, %v623
          %v769 = vpack.c.b16 %v629, %v624
          %v770 = vpack.c.b16 %v630, %v625
          %v771 = vpack.c.b16 %v631, %v626
          %v772 = vpack.c.b16 %v632, %v627
          %v773 = vpack.c.b16 %v638, %v633
          %v774 = vpack.c.b16 %v639, %v634
          %v775 = vpack.c.b16 %v640, %v635
          %v776 = vpack.c.b16 %v641, %v636
          %v777 = vpack.c.b16 %v642, %v637
          %v778 = vpack.c.b16 %v648, %v643
          %v779 = vpack.c.b16 %v649, %v644
          %v780 = vpack.c.b16 %v650, %v645
          %v781 = vpack.c.b16 %v651, %v646
          %v782 = vpack.c.b16 %v652, %v647
          %v783 = vpack.c.b16 %v658, %v653
          %v784 = vpack.c.b16 %v659, %v654
          %v785 = vpack.c.b16 %v660, %v655
          %v786 = vpack.c.b16 %v661, %v656
          %v787 = vpack.c.b16 %v662, %v657
          %v788 = vpack.c.b16 %v668, %v663
          %v789 = vpack.c.b16 %v669, %v664
          %v790 = vpack.c.b16 %v670, %v665
          %v791 = vpack.c.b16 %v671, %v666
          %v792 = vpack.c.b16 %v672, %v667
          %v793 = vpack.c.b16 %v678, %v673
          %v794 = vpack.c.b16 %v679, %v674
          %v795 = vpack.c.b16 %v680, %v675
          %v796 = vpack.c.b16 %v681, %v676
          %v797 = vpack.c.b16 %v682, %v677
          %v798 = vpack.c.b16 %v688, %v683
          %v799 = vpack.c.b16 %v689, %v684
          %v800 = vpack.c.b16 %v690, %v685
          %v801 = vpack.c.b16 %v691, %v686
          %v802 = vpack.c.b16 %v692, %v687
          %v803 = vpack.c.b16 %v698, %v693
          %v804 = vpack.c.b16 %v699, %v694
          %v805 = vpack.c.b16 %v700, %v695
          %v806 = vpack.c.b16 %v701, %v696
          %v807 = vpack.c.b16 %v702, %v697
          %v808 = vpack.c.b16 %v708, %v703
          %v809 = vpack.c.b16 %v709, %v704
          %v810 = vpack.c.b16 %v710, %v705
          %v811 = vpack.c.b16 %v711, %v706
          %v812 = vpack.c.b16 %v712, %v707
          %v813 = vpack.c.b16 %v718, %v713
          %v814 = vpack.c.b16 %v719, %v714
          %v815 = vpack.c.b16 %v720, %v715
          %v816 = vpack.c.b16 %v721, %v716
          %v817 = vpack.c.b16 %v722, %v717
          %v818 = vpack.c.b16 %v728, %v723
          %v819 = vpack.c.b16 %v729, %v724
          %v820 = vpack.c.b16 %v730, %v725
          %v821 = vpack.c.b16 %v731, %v726
          %v822 = vpack.c.b16 %v732, %v727
          %v823 = vpack.c.b16 %v738, %v733
          %v824 = vpack.c.b16 %v739, %v734
          %v825 = vpack.c.b16 %v740, %v735
          %v826 = vpack.c.b16 %v741, %v736
          %v827 = vpack.c.b16 %v742, %v737
          %v828 = vpack.c.b16 %v748, %v743
          %v829 = vpack.c.b16 %v749, %v744
          %v830 = vpack.c.b16 %v750, %v745
          %v831 = vpack.c.b16 %v751, %v746
          %v832 = vpack.c.b16 %v752, %v747
          %v971 = vunpack.c.l.b16 %v419
          %v972 = vunpack.c.l.b16 %v420
          %v973 = vunpack.c.l.b16 %v421
          %v974 = vunpack.c.l.b16 %v422
          %v975 = vunpack.c.l.b16 %v423
          %v976 = vunpack.c.l.b16 %v424
          %v977 = vunpack.c.l.b16 %v425
          %v978 = vunpack.c.l.b16 %v426
          %v979 = vunpack.c.l.b16 %v427
          %v980 = vunpack.c.l.b16 %v428
          %v981 = vunpack.c.l.b16 %v429
          %v982 = vunpack.c.l.b16 %v430
          %v983 = vunpack.c.l.b16 %v431
          %v984 = vunpack.c.l.b16 %v432
          %v985 = vunpack.c.l.b16 %v433
          %v986 = vunpack.c.l.b16 %v434
          %v987 = vunpack.c.l.b16 %v435
          %v988 = vunpack.c.l.b16 %v436
          %v989 = vunpack.c.l.b16 %v437
          %v990 = vunpack.c.l.b16 %v438
          %v991 = vunpack.c.l.b16 %v439
          %v992 = vunpack.c.l.b16 %v440
          %v993 = vunpack.c.l.b16 %v441
          %v994 = vunpack.c.l.b16 %v442
          %v995 = vunpack.c.l.b16 %v443
          %v996 = vunpack.c.l.b16 %v444
          %v997 = vunpack.c.l.b16 %v445
          %v998 = vunpack.c.l.b16 %v446
          %v999 = vunpack.c.l.b16 %v447
          %v1000 = vunpack.c.l.b16 %v448
          %v1001 = vunpack.c.l.b16 %v449
          %v1002 = vunpack.c.l.b16 %v450
          %v1003 = vunpack.c.l.b16 %v451
          %v1004 = vunpack.c.l.b16 %v452
          %v1005 = vunpack.c.l.b16 %v453
          %v1006 = vunpack.c.l.b16 %v454
          %v1007 = vunpack.c.l.b16 %v455
          %v1008 = vunpack.c.l.b16 %v456
          %v1009 = vunpack.c.l.b16 %v457
          %v1010 = vunpack.c.l.b16 %v458
          %v1011 = vunpack.c.l.b16 %v459
          %v1012 = vunpack.c.l.b16 %v460
          %v1013 = vunpack.c.l.b16 %v461
          %v1014 = vunpack.c.l.b16 %v462
          %v1015 = vunpack.c.l.b16 %v463
          %v1016 = vunpack.c.l.b16 %v464
          %v1017 = vunpack.c.l.b16 %v465
          %v1018 = vunpack.c.l.b16 %v466
          %v1019 = vunpack.c.l.b16 %v467
          %v1020 = vunpack.c.l.b16 %v468
          %v1021 = vunpack.c.l.b16 %v469
          %v1022 = vunpack.c.l.b16 %v470
          %v1023 = vunpack.c.l.b16 %v471
          %v1024 = vunpack.c.l.b16 %v472
          %v1025 = vunpack.c.l.b16 %v473
          %v1026 = vunpack.c.l.b16 %v474
          %v1027 = vunpack.c.l.b16 %v475
          %v1028 = vunpack.c.l.b16 %v476
          %v1029 = vunpack.c.l.b16 %v477
          %v1030 = vunpack.c.l.b16 %v478
          %v1031 = vunpack.c.l.b16 %v479
          %v1032 = vunpack.c.l.b16 %v480
          %v1033 = vunpack.c.l.b16 %v481
          %v1034 = vunpack.c.l.b16 %v482
          %v1035 = vunpack.c.l.b16 %v483
          %v1036 = vunpack.c.l.b16 %v484
          %v1037 = vunpack.c.l.b16 %v485
          %v1038 = vunpack.c.l.b16 %v486
          %v1039 = vunpack.c.l.b16 %v487
          %v1040 = vunpack.c.l.b16 %v488
          %v1041 = vunpack.c.l.b16 %v489
          %v1042 = vunpack.c.l.b16 %v490
          %v1043 = vunpack.c.l.b16 %v491
          %v1044 = vunpack.c.l.b16 %v492
          %v1045 = vpack.c.b16 %v972, %v971
          %v1046 = vpack.c.b16 %v974, %v973
          %v1047 = vpack.c.b16 %v976, %v975
          %v1048 = vpack.c.b16 %v978, %v977
          %v1049 = vpack.c.b16 %v980, %v979
          %v1050 = vpack.c.b16 %v982, %v981
          %v1051 = vpack.c.b16 %v984, %v983
          %v1052 = vpack.c.b16 %v986, %v985
          %v1053 = vpack.c.b16 %v988, %v987
          %v1054 = vpack.c.b16 %v990, %v989
          %v1055 = vpack.c.b16 %v992, %v991
          %v1056 = vpack.c.b16 %v994, %v993
          %v1057 = vpack.c.b16 %v996, %v995
          %v1058 = vpack.c.b16 %v998, %v997
          %v1059 = vpack.c.b16 %v1000, %v999
          %v1060 = vpack.c.b16 %v1002, %v1001
          %v1061 = vpack.c.b16 %v1004, %v1003
          %v1062 = vpack.c.b16 %v1006, %v1005
          %v1063 = vpack.c.b16 %v1008, %v1007
          %v1064 = vpack.c.b16 %v1010, %v1009
          %v1065 = vpack.c.b16 %v1012, %v1011
          %v1066 = vpack.c.b16 %v1014, %v1013
          %v1067 = vpack.c.b16 %v1016, %v1015
          %v1068 = vpack.c.b16 %v1018, %v1017
          %v1069 = vpack.c.b16 %v1020, %v1019
          %v1070 = vpack.c.b16 %v1022, %v1021
          %v1071 = vpack.c.b16 %v1024, %v1023
          %v1072 = vpack.c.b16 %v1026, %v1025
          %v1073 = vpack.c.b16 %v1028, %v1027
          %v1074 = vpack.c.b16 %v1030, %v1029
          %v1075 = vpack.c.b16 %v1032, %v1031
          %v1076 = vpack.c.b16 %v1034, %v1033
          %v1077 = vpack.c.b16 %v1036, %v1035
          %v1078 = vpack.c.b16 %v1038, %v1037
          %v1079 = vpack.c.b16 %v1040, %v1039
          %v1080 = vpack.c.b16 %v1042, %v1041
          %v1081 = vpack.c.b16 %v1044, %v1043
          %vm1118 = vcmask 621568
          %v1120 = vsel %vm1118, %v757, 0
          %v1123 = vsel %vm1118, %v762, 0
          %v1126 = vsel %vm1118, %v767, 0
          %v1129 = vsel %vm1118, %v772, 0
          %v1132 = vsel %vm1118, %v777, 0
          %v1135 = vsel %vm1118, %v782, 0
          %v1138 = vsel %vm1118, %v787, 0
          %v1141 = vsel %vm1118, %v792, 0
          %v1144 = vsel %vm1118, %v797, 0
          %v1147 = vsel %vm1118, %v802, 0
          %v1150 = vsel %vm1118, %v807, 0
          %v1153 = vsel %vm1118, %v812, 0
          %v1156 = vsel %vm1118, %v817, 0
          %v1159 = vsel %vm1118, %v822, 0
          %v1162 = vsel %vm1118, %v827, 0
          %v1165 = vsel %vm1118, %v832, 0
          %vm1167 = vcmask 1045504
          %v1169 = vsel %vm1167, %v1081, 0
          %1171 = vmatpush.bf16.msra.mxu0 %v1052
          %1172 = vmatpush.bf16.msra.mxu0 %v1051
          %1173 = vmatpush.bf16.msra.mxu0 %v1050
          %1174 = vmatpush.bf16.msra.mxu0 %v1049
          %1175 = vmatpush.bf16.msra.mxu0 %v1048
          %1176 = vmatpush.bf16.msra.mxu0 %v1047
          %1177 = vmatpush.bf16.msra.mxu0 %v1046
          %1178 = vmatpush.bf16.msra.mxu0 %v1045
          %1179 = vmatmul.bf16.gmra.mxu0 %v753
          %v1180 = vpop.f32.mrf.mxu0
          %v1181 = vadd.f32 %v495, %v1180
          %v1182 = vpop.f32.mrf.mxu0
          %v1183 = vadd.f32 %v495, %v1182
          %1184 = vmatmul.bf16.gmra.mxu0 %v758
          %v1185 = vpop.f32.mrf.mxu0
          %v1186 = vadd.f32 %v495, %v1185
          %v1187 = vpop.f32.mrf.mxu0
          %v1188 = vadd.f32 %v495, %v1187
          %1189 = vmatmul.bf16.gmra.mxu0 %v763
          %v1190 = vpop.f32.mrf.mxu0
          %v1191 = vadd.f32 %v495, %v1190
          %v1192 = vpop.f32.mrf.mxu0
          %v1193 = vadd.f32 %v495, %v1192
          %1194 = vmatmul.bf16.gmra.mxu0 %v768
          %v1195 = vpop.f32.mrf.mxu0
          %v1196 = vadd.f32 %v495, %v1195
          %v1197 = vpop.f32.mrf.mxu0
          %v1198 = vadd.f32 %v495, %v1197
          %1199 = vmatmul.bf16.gmra.mxu0 %v773
          %v1200 = vpop.f32.mrf.mxu0
          %v1201 = vadd.f32 %v495, %v1200
          %v1202 = vpop.f32.mrf.mxu0
          %v1203 = vadd.f32 %v495, %v1202
          %1204 = vmatmul.bf16.gmra.mxu0 %v778
          %v1205 = vpop.f32.mrf.mxu0
          %v1206 = vadd.f32 %v495, %v1205
          %v1207 = vpop.f32.mrf.mxu0
          %v1208 = vadd.f32 %v495, %v1207
          %1209 = vmatmul.bf16.gmra.mxu0 %v783
          %v1210 = vpop.f32.mrf.mxu0
          %v1211 = vadd.f32 %v495, %v1210
          %v1212 = vpop.f32.mrf.mxu0
          %v1213 = vadd.f32 %v495, %v1212
          %1214 = vmatmul.bf16.gmra.mxu0 %v788
          %v1215 = vpop.f32.mrf.mxu0
          %v1216 = vadd.f32 %v495, %v1215
          %v1217 = vpop.f32.mrf.mxu0
          %v1218 = vadd.f32 %v495, %v1217
          %1219 = vmatmul.bf16.gmra.mxu0 %v793
          %v1220 = vpop.f32.mrf.mxu0
          %v1221 = vadd.f32 %v495, %v1220
          %v1222 = vpop.f32.mrf.mxu0
          %v1223 = vadd.f32 %v495, %v1222
          %1224 = vmatmul.bf16.gmra.mxu0 %v798
          %v1225 = vpop.f32.mrf.mxu0
          %v1226 = vadd.f32 %v495, %v1225
          %v1227 = vpop.f32.mrf.mxu0
          %v1228 = vadd.f32 %v495, %v1227
          %1229 = vmatmul.bf16.gmra.mxu0 %v803
          %v1230 = vpop.f32.mrf.mxu0
          %v1231 = vadd.f32 %v495, %v1230
          %v1232 = vpop.f32.mrf.mxu0
          %v1233 = vadd.f32 %v495, %v1232
          %1234 = vmatmul.bf16.gmra.mxu0 %v808
          %v1235 = vpop.f32.mrf.mxu0
          %v1236 = vadd.f32 %v495, %v1235
          %v1237 = vpop.f32.mrf.mxu0
          %v1238 = vadd.f32 %v495, %v1237
          %1239 = vmatmul.bf16.gmra.mxu0 %v813
          %v1240 = vpop.f32.mrf.mxu0
          %v1241 = vadd.f32 %v495, %v1240
          %v1242 = vpop.f32.mrf.mxu0
          %v1243 = vadd.f32 %v495, %v1242
          %1244 = vmatmul.bf16.gmra.mxu0 %v818
          %v1245 = vpop.f32.mrf.mxu0
          %v1246 = vadd.f32 %v495, %v1245
          %v1247 = vpop.f32.mrf.mxu0
          %v1248 = vadd.f32 %v495, %v1247
          %1249 = vmatmul.bf16.gmra.mxu0 %v823
          %v1250 = vpop.f32.mrf.mxu0
          %v1251 = vadd.f32 %v495, %v1250
          %v1252 = vpop.f32.mrf.mxu0
          %v1253 = vadd.f32 %v495, %v1252
          %1254 = vmatmul.bf16.gmra.mxu0 %v828
          %v1255 = vpop.f32.mrf.mxu0
          %v1256 = vadd.f32 %v495, %v1255
          %v1257 = vpop.f32.mrf.mxu0
          %v1258 = vadd.f32 %v495, %v1257
          %1259 = vdwg.mxu0
          %1260 = vmatpush.bf16.msra.mxu0 %v1060
          %1261 = vmatpush.bf16.msra.mxu0 %v1059
          %1262 = vmatpush.bf16.msra.mxu0 %v1058
          %1263 = vmatpush.bf16.msra.mxu0 %v1057
          %1264 = vmatpush.bf16.msra.mxu0 %v1056
          %1265 = vmatpush.bf16.msra.mxu0 %v1055
          %1266 = vmatpush.bf16.msra.mxu0 %v1054
          %1267 = vmatpush.bf16.msra.mxu0 %v1053
          %1268 = vmatmul.bf16.gmra.mxu0 %v754
          %v1269 = vpop.f32.mrf.mxu0
          %v1270 = vadd.f32 %v1181, %v1269
          %v1271 = vpop.f32.mrf.mxu0
          %v1272 = vadd.f32 %v1183, %v1271
          %1273 = vmatmul.bf16.gmra.mxu0 %v759
          %v1274 = vpop.f32.mrf.mxu0
          %v1275 = vadd.f32 %v1186, %v1274
          %v1276 = vpop.f32.mrf.mxu0
          %v1277 = vadd.f32 %v1188, %v1276
          %1278 = vmatmul.bf16.gmra.mxu0 %v764
          %v1279 = vpop.f32.mrf.mxu0
          %v1280 = vadd.f32 %v1191, %v1279
          %v1281 = vpop.f32.mrf.mxu0
          %v1282 = vadd.f32 %v1193, %v1281
          %1283 = vmatmul.bf16.gmra.mxu0 %v769
          %v1284 = vpop.f32.mrf.mxu0
          %v1285 = vadd.f32 %v1196, %v1284
          %v1286 = vpop.f32.mrf.mxu0
          %v1287 = vadd.f32 %v1198, %v1286
          %1288 = vmatmul.bf16.gmra.mxu0 %v774
          %v1289 = vpop.f32.mrf.mxu0
          %v1290 = vadd.f32 %v1201, %v1289
          %v1291 = vpop.f32.mrf.mxu0
          %v1292 = vadd.f32 %v1203, %v1291
          %1293 = vmatmul.bf16.gmra.mxu0 %v779
          %v1294 = vpop.f32.mrf.mxu0
          %v1295 = vadd.f32 %v1206, %v1294
          %v1296 = vpop.f32.mrf.mxu0
          %v1297 = vadd.f32 %v1208, %v1296
          %1298 = vmatmul.bf16.gmra.mxu0 %v784
          %v1299 = vpop.f32.mrf.mxu0
          %v1300 = vadd.f32 %v1211, %v1299
          %v1301 = vpop.f32.mrf.mxu0
          %v1302 = vadd.f32 %v1213, %v1301
          %1303 = vmatmul.bf16.gmra.mxu0 %v789
          %v1304 = vpop.f32.mrf.mxu0
          %v1305 = vadd.f32 %v1216, %v1304
          %v1306 = vpop.f32.mrf.mxu0
          %v1307 = vadd.f32 %v1218, %v1306
          %1308 = vmatmul.bf16.gmra.mxu0 %v794
          %v1309 = vpop.f32.mrf.mxu0
          %v1310 = vadd.f32 %v1221, %v1309
          %v1311 = vpop.f32.mrf.mxu0
          %v1312 = vadd.f32 %v1223, %v1311
          %1313 = vmatmul.bf16.gmra.mxu0 %v799
          %v1314 = vpop.f32.mrf.mxu0
          %v1315 = vadd.f32 %v1226, %v1314
          %v1316 = vpop.f32.mrf.mxu0
          %v1317 = vadd.f32 %v1228, %v1316
          %1318 = vmatmul.bf16.gmra.mxu0 %v804
          %v1319 = vpop.f32.mrf.mxu0
          %v1320 = vadd.f32 %v1231, %v1319
          %v1321 = vpop.f32.mrf.mxu0
          %v1322 = vadd.f32 %v1233, %v1321
          %1323 = vmatmul.bf16.gmra.mxu0 %v809
          %v1324 = vpop.f32.mrf.mxu0
          %v1325 = vadd.f32 %v1236, %v1324
          %v1326 = vpop.f32.mrf.mxu0
          %v1327 = vadd.f32 %v1238, %v1326
          %1328 = vmatmul.bf16.gmra.mxu0 %v814
          %v1329 = vpop.f32.mrf.mxu0
          %v1330 = vadd.f32 %v1241, %v1329
          %v1331 = vpop.f32.mrf.mxu0
          %v1332 = vadd.f32 %v1243, %v1331
          %1333 = vmatmul.bf16.gmra.mxu0 %v819
          %v1334 = vpop.f32.mrf.mxu0
          %v1335 = vadd.f32 %v1246, %v1334
          %v1336 = vpop.f32.mrf.mxu0
          %v1337 = vadd.f32 %v1248, %v1336
          %1338 = vmatmul.bf16.gmra.mxu0 %v824
          %v1339 = vpop.f32.mrf.mxu0
          %v1340 = vadd.f32 %v1251, %v1339
          %v1341 = vpop.f32.mrf.mxu0
          %v1342 = vadd.f32 %v1253, %v1341
          %1343 = vmatmul.bf16.gmra.mxu0 %v829
          %v1344 = vpop.f32.mrf.mxu0
          %v1345 = vadd.f32 %v1256, %v1344
          %v1346 = vpop.f32.mrf.mxu0
          %v1347 = vadd.f32 %v1258, %v1346
          %1348 = vdwg.mxu0
          %1349 = vmatpush.bf16.msra.mxu0 %v1068
          %1350 = vmatpush.bf16.msra.mxu0 %v1067
          %1351 = vmatpush.bf16.msra.mxu0 %v1066
          %1352 = vmatpush.bf16.msra.mxu0 %v1065
          %1353 = vmatpush.bf16.msra.mxu0 %v1064
          %1354 = vmatpush.bf16.msra.mxu0 %v1063
          %1355 = vmatpush.bf16.msra.mxu0 %v1062
          %1356 = vmatpush.bf16.msra.mxu0 %v1061
          %1357 = vmatmul.bf16.gmra.mxu0 %v755
          %v1358 = vpop.f32.mrf.mxu0
          %v1359 = vadd.f32 %v1270, %v1358
          %v1360 = vpop.f32.mrf.mxu0
          %v1361 = vadd.f32 %v1272, %v1360
          %1362 = vmatmul.bf16.gmra.mxu0 %v760
          %v1363 = vpop.f32.mrf.mxu0
          %v1364 = vadd.f32 %v1275, %v1363
          %v1365 = vpop.f32.mrf.mxu0
          %v1366 = vadd.f32 %v1277, %v1365
          %1367 = vmatmul.bf16.gmra.mxu0 %v765
          %v1368 = vpop.f32.mrf.mxu0
          %v1369 = vadd.f32 %v1280, %v1368
          %v1370 = vpop.f32.mrf.mxu0
          %v1371 = vadd.f32 %v1282, %v1370
          %1372 = vmatmul.bf16.gmra.mxu0 %v770
          %v1373 = vpop.f32.mrf.mxu0
          %v1374 = vadd.f32 %v1285, %v1373
          %v1375 = vpop.f32.mrf.mxu0
          %v1376 = vadd.f32 %v1287, %v1375
          %1377 = vmatmul.bf16.gmra.mxu0 %v775
          %v1378 = vpop.f32.mrf.mxu0
          %v1379 = vadd.f32 %v1290, %v1378
          %v1380 = vpop.f32.mrf.mxu0
          %v1381 = vadd.f32 %v1292, %v1380
          %1382 = vmatmul.bf16.gmra.mxu0 %v780
          %v1383 = vpop.f32.mrf.mxu0
          %v1384 = vadd.f32 %v1295, %v1383
          %v1385 = vpop.f32.mrf.mxu0
          %v1386 = vadd.f32 %v1297, %v1385
          %1387 = vmatmul.bf16.gmra.mxu0 %v785
          %v1388 = vpop.f32.mrf.mxu0
          %v1389 = vadd.f32 %v1300, %v1388
          %v1390 = vpop.f32.mrf.mxu0
          %v1391 = vadd.f32 %v1302, %v1390
          %1392 = vmatmul.bf16.gmra.mxu0 %v790
          %v1393 = vpop.f32.mrf.mxu0
          %v1394 = vadd.f32 %v1305, %v1393
          %v1395 = vpop.f32.mrf.mxu0
          %v1396 = vadd.f32 %v1307, %v1395
          %1397 = vmatmul.bf16.gmra.mxu0 %v795
          %v1398 = vpop.f32.mrf.mxu0
          %v1399 = vadd.f32 %v1310, %v1398
          %v1400 = vpop.f32.mrf.mxu0
          %v1401 = vadd.f32 %v1312, %v1400
          %1402 = vmatmul.bf16.gmra.mxu0 %v800
          %v1403 = vpop.f32.mrf.mxu0
          %v1404 = vadd.f32 %v1315, %v1403
          %v1405 = vpop.f32.mrf.mxu0
          %v1406 = vadd.f32 %v1317, %v1405
          %1407 = vmatmul.bf16.gmra.mxu0 %v805
          %v1408 = vpop.f32.mrf.mxu0
          %v1409 = vadd.f32 %v1320, %v1408
          %v1410 = vpop.f32.mrf.mxu0
          %v1411 = vadd.f32 %v1322, %v1410
          %1412 = vmatmul.bf16.gmra.mxu0 %v810
          %v1413 = vpop.f32.mrf.mxu0
          %v1414 = vadd.f32 %v1325, %v1413
          %v1415 = vpop.f32.mrf.mxu0
          %v1416 = vadd.f32 %v1327, %v1415
          %1417 = vmatmul.bf16.gmra.mxu0 %v815
          %v1418 = vpop.f32.mrf.mxu0
          %v1419 = vadd.f32 %v1330, %v1418
          %v1420 = vpop.f32.mrf.mxu0
          %v1421 = vadd.f32 %v1332, %v1420
          %1422 = vmatmul.bf16.gmra.mxu0 %v820
          %v1423 = vpop.f32.mrf.mxu0
          %v1424 = vadd.f32 %v1335, %v1423
          %v1425 = vpop.f32.mrf.mxu0
          %v1426 = vadd.f32 %v1337, %v1425
          %1427 = vmatmul.bf16.gmra.mxu0 %v825
          %v1428 = vpop.f32.mrf.mxu0
          %v1429 = vadd.f32 %v1340, %v1428
          %v1430 = vpop.f32.mrf.mxu0
          %v1431 = vadd.f32 %v1342, %v1430
          %1432 = vmatmul.bf16.gmra.mxu0 %v830
          %v1433 = vpop.f32.mrf.mxu0
          %v1434 = vadd.f32 %v1345, %v1433
          %v1435 = vpop.f32.mrf.mxu0
          %v1436 = vadd.f32 %v1347, %v1435
          %1437 = vdwg.mxu0
          %1438 = vmatpush.bf16.msra.mxu0 %v1076
          %1439 = vmatpush.bf16.msra.mxu0 %v1075
          %1440 = vmatpush.bf16.msra.mxu0 %v1074
          %1441 = vmatpush.bf16.msra.mxu0 %v1073
          %1442 = vmatpush.bf16.msra.mxu0 %v1072
          %1443 = vmatpush.bf16.msra.mxu0 %v1071
          %1444 = vmatpush.bf16.msra.mxu0 %v1070
          %1445 = vmatpush.bf16.msra.mxu0 %v1069
          %1446 = vmatmul.bf16.gmra.mxu0 %v756
          %v1447 = vpop.f32.mrf.mxu0
          %v1448 = vadd.f32 %v1359, %v1447
          %v1449 = vpop.f32.mrf.mxu0
          %v1450 = vadd.f32 %v1361, %v1449
          %1451 = vmatmul.bf16.gmra.mxu0 %v761
          %v1452 = vpop.f32.mrf.mxu0
          %v1453 = vadd.f32 %v1364, %v1452
          %v1454 = vpop.f32.mrf.mxu0
          %v1455 = vadd.f32 %v1366, %v1454
          %1456 = vmatmul.bf16.gmra.mxu0 %v766
          %v1457 = vpop.f32.mrf.mxu0
          %v1458 = vadd.f32 %v1369, %v1457
          %v1459 = vpop.f32.mrf.mxu0
          %v1460 = vadd.f32 %v1371, %v1459
          %1461 = vmatmul.bf16.gmra.mxu0 %v771
          %v1462 = vpop.f32.mrf.mxu0
          %v1463 = vadd.f32 %v1374, %v1462
          %v1464 = vpop.f32.mrf.mxu0
          %v1465 = vadd.f32 %v1376, %v1464
          %1466 = vmatmul.bf16.gmra.mxu0 %v776
          %v1467 = vpop.f32.mrf.mxu0
          %v1468 = vadd.f32 %v1379, %v1467
          %v1469 = vpop.f32.mrf.mxu0
          %v1470 = vadd.f32 %v1381, %v1469
          %1471 = vmatmul.bf16.gmra.mxu0 %v781
          %v1472 = vpop.f32.mrf.mxu0
          %v1473 = vadd.f32 %v1384, %v1472
          %v1474 = vpop.f32.mrf.mxu0
          %v1475 = vadd.f32 %v1386, %v1474
          %1476 = vmatmul.bf16.gmra.mxu0 %v786
          %v1477 = vpop.f32.mrf.mxu0
          %v1478 = vadd.f32 %v1389, %v1477
          %v1479 = vpop.f32.mrf.mxu0
          %v1480 = vadd.f32 %v1391, %v1479
          %1481 = vmatmul.bf16.gmra.mxu0 %v791
          %v1482 = vpop.f32.mrf.mxu0
          %v1483 = vadd.f32 %v1394, %v1482
          %v1484 = vpop.f32.mrf.mxu0
          %v1485 = vadd.f32 %v1396, %v1484
          %1486 = vmatmul.bf16.gmra.mxu0 %v796
          %v1487 = vpop.f32.mrf.mxu0
          %v1488 = vadd.f32 %v1399, %v1487
          %v1489 = vpop.f32.mrf.mxu0
          %v1490 = vadd.f32 %v1401, %v1489
          %1491 = vmatmul.bf16.gmra.mxu0 %v801
          %v1492 = vpop.f32.mrf.mxu0
          %v1493 = vadd.f32 %v1404, %v1492
          %v1494 = vpop.f32.mrf.mxu0
          %v1495 = vadd.f32 %v1406, %v1494
          %1496 = vmatmul.bf16.gmra.mxu0 %v806
          %v1497 = vpop.f32.mrf.mxu0
          %v1498 = vadd.f32 %v1409, %v1497
          %v1499 = vpop.f32.mrf.mxu0
          %v1500 = vadd.f32 %v1411, %v1499
          %1501 = vmatmul.bf16.gmra.mxu0 %v811
          %v1502 = vpop.f32.mrf.mxu0
          %v1503 = vadd.f32 %v1414, %v1502
          %v1504 = vpop.f32.mrf.mxu0
          %v1505 = vadd.f32 %v1416, %v1504
          %1506 = vmatmul.bf16.gmra.mxu0 %v816
          %v1507 = vpop.f32.mrf.mxu0
          %v1508 = vadd.f32 %v1419, %v1507
          %v1509 = vpop.f32.mrf.mxu0
          %v1510 = vadd.f32 %v1421, %v1509
          %1511 = vmatmul.bf16.gmra.mxu0 %v821
          %v1512 = vpop.f32.mrf.mxu0
          %v1513 = vadd.f32 %v1424, %v1512
          %v1514 = vpop.f32.mrf.mxu0
          %v1515 = vadd.f32 %v1426, %v1514
          %1516 = vmatmul.bf16.gmra.mxu0 %v826
          %v1517 = vpop.f32.mrf.mxu0
          %v1518 = vadd.f32 %v1429, %v1517
          %v1519 = vpop.f32.mrf.mxu0
          %v1520 = vadd.f32 %v1431, %v1519
          %1521 = vmatmul.bf16.gmra.mxu0 %v831
          %v1522 = vpop.f32.mrf.mxu0
          %v1523 = vadd.f32 %v1434, %v1522
          %v1524 = vpop.f32.mrf.mxu0
          %v1525 = vadd.f32 %v1436, %v1524
          %1526 = vdwg.mxu0
          %1527 = vmatpush.bf16.msra.mxu0 0
          %1528 = vmatpush.bf16.msra.mxu0 0
          %1529 = vmatpush.bf16.msra.mxu0 0
          %1530 = vmatpush.bf16.msra.mxu0 %v1169
          %1531 = vmatpush.bf16.msra.mxu0 %v1080
          %1532 = vmatpush.bf16.msra.mxu0 %v1079
          %1533 = vmatpush.bf16.msra.mxu0 %v1078
          %1534 = vmatpush.bf16.msra.mxu0 %v1077
          %1535 = vmatmul.bf16.gmra.mxu0 %v1120
          %v1536 = vpop.f32.mrf.mxu0
          %v1537 = vadd.f32 %v1448, %v1536
          %v1538 = vpop.f32.mrf.mxu0
          %v1539 = vadd.f32 %v1450, %v1538
          %1540 = vmatmul.bf16.gmra.mxu0 %v1123
          %v1541 = vpop.f32.mrf.mxu0
          %v1542 = vadd.f32 %v1453, %v1541
          %v1543 = vpop.f32.mrf.mxu0
          %v1544 = vadd.f32 %v1455, %v1543
          %1545 = vmatmul.bf16.gmra.mxu0 %v1126
          %v1546 = vpop.f32.mrf.mxu0
          %v1547 = vadd.f32 %v1458, %v1546
          %v1548 = vpop.f32.mrf.mxu0
          %v1549 = vadd.f32 %v1460, %v1548
          %1550 = vmatmul.bf16.gmra.mxu0 %v1129
          %v1551 = vpop.f32.mrf.mxu0
          %v1552 = vadd.f32 %v1463, %v1551
          %v1553 = vpop.f32.mrf.mxu0
          %v1554 = vadd.f32 %v1465, %v1553
          %1555 = vmatmul.bf16.gmra.mxu0 %v1132
          %v1556 = vpop.f32.mrf.mxu0
          %v1557 = vadd.f32 %v1468, %v1556
          %v1558 = vpop.f32.mrf.mxu0
          %v1559 = vadd.f32 %v1470, %v1558
          %1560 = vmatmul.bf16.gmra.mxu0 %v1135
          %v1561 = vpop.f32.mrf.mxu0
          %v1562 = vadd.f32 %v1473, %v1561
          %v1563 = vpop.f32.mrf.mxu0
          %v1564 = vadd.f32 %v1475, %v1563
          %1565 = vmatmul.bf16.gmra.mxu0 %v1138
          %v1566 = vpop.f32.mrf.mxu0
          %v1567 = vadd.f32 %v1478, %v1566
          %v1568 = vpop.f32.mrf.mxu0
          %v1569 = vadd.f32 %v1480, %v1568
          %1570 = vmatmul.bf16.gmra.mxu0 %v1141
          %v1571 = vpop.f32.mrf.mxu0
          %v1572 = vadd.f32 %v1483, %v1571
          %v1573 = vpop.f32.mrf.mxu0
          %v1574 = vadd.f32 %v1485, %v1573
          %1575 = vmatmul.bf16.gmra.mxu0 %v1144
          %v1576 = vpop.f32.mrf.mxu0
          %v1577 = vadd.f32 %v1488, %v1576
          %v1578 = vpop.f32.mrf.mxu0
          %v1579 = vadd.f32 %v1490, %v1578
          %1580 = vmatmul.bf16.gmra.mxu0 %v1147
          %v1581 = vpop.f32.mrf.mxu0
          %v1582 = vadd.f32 %v1493, %v1581
          %v1583 = vpop.f32.mrf.mxu0
          %v1584 = vadd.f32 %v1495, %v1583
          %1585 = vmatmul.bf16.gmra.mxu0 %v1150
          %v1586 = vpop.f32.mrf.mxu0
          %v1587 = vadd.f32 %v1498, %v1586
          %v1588 = vpop.f32.mrf.mxu0
          %v1589 = vadd.f32 %v1500, %v1588
          %1590 = vmatmul.bf16.gmra.mxu0 %v1153
          %v1591 = vpop.f32.mrf.mxu0
          %v1592 = vadd.f32 %v1503, %v1591
          %v1593 = vpop.f32.mrf.mxu0
          %v1594 = vadd.f32 %v1505, %v1593
          %1595 = vmatmul.bf16.gmra.mxu0 %v1156
          %v1596 = vpop.f32.mrf.mxu0
          %v1597 = vadd.f32 %v1508, %v1596
          %v1598 = vpop.f32.mrf.mxu0
          %v1599 = vadd.f32 %v1510, %v1598
          %1600 = vmatmul.bf16.gmra.mxu0 %v1159
          %v1601 = vpop.f32.mrf.mxu0
          %v1602 = vadd.f32 %v1513, %v1601
          %v1603 = vpop.f32.mrf.mxu0
          %v1604 = vadd.f32 %v1515, %v1603
          %1605 = vmatmul.bf16.gmra.mxu0 %v1162
          %v1606 = vpop.f32.mrf.mxu0
          %v1607 = vadd.f32 %v1518, %v1606
          %v1608 = vpop.f32.mrf.mxu0
          %v1609 = vadd.f32 %v1520, %v1608
          %1610 = vmatmul.bf16.gmra.mxu0 %v1165
          %v1611 = vpop.f32.mrf.mxu0
          %v1612 = vadd.f32 %v1523, %v1611
          %v1613 = vpop.f32.mrf.mxu0
          %v1614 = vadd.f32 %v1525, %v1613
          %1615 = vdwg.mxu0
          %vm1616 = vcmask 261120
          %v1617 = vsel %vm1616, %v1537, 0.0
          %1618 = vadd.xlane.f32.xlu0 %v1617
          %v1619 = vpop.xlane.xlu0 %1618
          %v1620 = vsel %vm1616, %v1539, 0.0
          %1621 = vadd.xlane.f32.xlu0 %v1620
          %v1622 = vpop.xlane.xlu0 %1621
          %v1623 = vsel %vm1616, %v1542, 0.0
          %1624 = vadd.xlane.f32.xlu0 %v1623
          %v1625 = vpop.xlane.xlu0 %1624
          %v1626 = vsel %vm1616, %v1544, 0.0
          %1627 = vadd.xlane.f32.xlu0 %v1626
          %v1628 = vpop.xlane.xlu0 %1627
          %v1629 = vsel %vm1616, %v1547, 0.0
          %1630 = vadd.xlane.f32.xlu0 %v1629
          %v1631 = vpop.xlane.xlu0 %1630
          %v1632 = vsel %vm1616, %v1549, 0.0
          %1633 = vadd.xlane.f32.xlu0 %v1632
          %v1634 = vpop.xlane.xlu0 %1633
          %v1635 = vsel %vm1616, %v1552, 0.0
          %1636 = vadd.xlane.f32.xlu0 %v1635
          %v1637 = vpop.xlane.xlu0 %1636
          %v1638 = vsel %vm1616, %v1554, 0.0
          %1639 = vadd.xlane.f32.xlu0 %v1638
          %v1640 = vpop.xlane.xlu0 %1639
          %v1641 = vsel %vm1616, %v1557, 0.0
          %1642 = vadd.xlane.f32.xlu0 %v1641
          %v1643 = vpop.xlane.xlu0 %1642
          %v1644 = vsel %vm1616, %v1559, 0.0
          %1645 = vadd.xlane.f32.xlu0 %v1644
          %v1646 = vpop.xlane.xlu0 %1645
          %v1647 = vsel %vm1616, %v1562, 0.0
          %1648 = vadd.xlane.f32.xlu0 %v1647
          %v1649 = vpop.xlane.xlu0 %1648
          %v1650 = vsel %vm1616, %v1564, 0.0
          %1651 = vadd.xlane.f32.xlu0 %v1650
          %v1652 = vpop.xlane.xlu0 %1651
          %v1653 = vsel %vm1616, %v1567, 0.0
          %1654 = vadd.xlane.f32.xlu0 %v1653
          %v1655 = vpop.xlane.xlu0 %1654
          %v1656 = vsel %vm1616, %v1569, 0.0
          %1657 = vadd.xlane.f32.xlu0 %v1656
          %v1658 = vpop.xlane.xlu0 %1657
          %v1659 = vsel %vm1616, %v1572, 0.0
          %1660 = vadd.xlane.f32.xlu0 %v1659
          %v1661 = vpop.xlane.xlu0 %1660
          %v1662 = vsel %vm1616, %v1574, 0.0
          %1663 = vadd.xlane.f32.xlu0 %v1662
          %v1664 = vpop.xlane.xlu0 %1663
          %v1665 = vsel %vm1616, %v1577, 0.0
          %1666 = vadd.xlane.f32.xlu0 %v1665
          %v1667 = vpop.xlane.xlu0 %1666
          %v1668 = vsel %vm1616, %v1579, 0.0
          %1669 = vadd.xlane.f32.xlu0 %v1668
          %v1670 = vpop.xlane.xlu0 %1669
          %v1671 = vsel %vm1616, %v1582, 0.0
          %1672 = vadd.xlane.f32.xlu0 %v1671
          %v1673 = vpop.xlane.xlu0 %1672
          %v1674 = vsel %vm1616, %v1584, 0.0
          %1675 = vadd.xlane.f32.xlu0 %v1674
          %v1676 = vpop.xlane.xlu0 %1675
          %v1677 = vsel %vm1616, %v1587, 0.0
          %1678 = vadd.xlane.f32.xlu0 %v1677
          %v1679 = vpop.xlane.xlu0 %1678
          %v1680 = vsel %vm1616, %v1589, 0.0
          %1681 = vadd.xlane.f32.xlu0 %v1680
          %v1682 = vpop.xlane.xlu0 %1681
          %v1683 = vsel %vm1616, %v1592, 0.0
          %1684 = vadd.xlane.f32.xlu0 %v1683
          %v1685 = vpop.xlane.xlu0 %1684
          %v1686 = vsel %vm1616, %v1594, 0.0
          %1687 = vadd.xlane.f32.xlu0 %v1686
          %v1688 = vpop.xlane.xlu0 %1687
          %v1689 = vsel %vm1616, %v1597, 0.0
          %1690 = vadd.xlane.f32.xlu0 %v1689
          %v1691 = vpop.xlane.xlu0 %1690
          %v1692 = vsel %vm1616, %v1599, 0.0
          %1693 = vadd.xlane.f32.xlu0 %v1692
          %v1694 = vpop.xlane.xlu0 %1693
          %v1695 = vsel %vm1616, %v1602, 0.0
          %1696 = vadd.xlane.f32.xlu0 %v1695
          %v1697 = vpop.xlane.xlu0 %1696
          %v1698 = vsel %vm1616, %v1604, 0.0
          %1699 = vadd.xlane.f32.xlu0 %v1698
          %v1700 = vpop.xlane.xlu0 %1699
          %v1701 = vsel %vm1616, %v1607, 0.0
          %1702 = vadd.xlane.f32.xlu0 %v1701
          %v1703 = vpop.xlane.xlu0 %1702
          %v1704 = vsel %vm1616, %v1609, 0.0
          %1705 = vadd.xlane.f32.xlu0 %v1704
          %v1706 = vpop.xlane.xlu0 %1705
          %v1707 = vsel %vm1616, %v1612, 0.0
          %1708 = vadd.xlane.f32.xlu0 %v1707
          %v1709 = vpop.xlane.xlu0 %1708
          %v1710 = vsel %vm1616, %v1614, 0.0
          %1711 = vadd.xlane.f32.xlu0 %v1710
          %v1712 = vpop.xlane.xlu0 %1711
          %v1713 = vrcp.pop 32.0
          %v1714 = vmul.f32 32.0, %v1713
          %v1715 = vsub.f32 1.0, %v1714
          %v1716 = vmul.f32 %v1713, %v1715
          %v1717 = vadd.f32 %v1713, %v1716
          %vm1718 = vweird.f32 %v1713
          %v1719 = vsel %vm1718, %v1713, %v1717
          %v1720 = vmul.f32 %v1619, %v1719
          %v1721 = vmul.f32 %v1622, %v1719
          %v1722 = vmul.f32 %v1625, %v1719
          %v1723 = vmul.f32 %v1628, %v1719
          %v1724 = vmul.f32 %v1631, %v1719
          %v1725 = vmul.f32 %v1634, %v1719
          %v1726 = vmul.f32 %v1637, %v1719
          %v1727 = vmul.f32 %v1640, %v1719
          %v1728 = vmul.f32 %v1643, %v1719
          %v1729 = vmul.f32 %v1646, %v1719
          %v1730 = vmul.f32 %v1649, %v1719
          %v1731 = vmul.f32 %v1652, %v1719
          %v1732 = vmul.f32 %v1655, %v1719
          %v1733 = vmul.f32 %v1658, %v1719
          %v1734 = vmul.f32 %v1661, %v1719
          %v1735 = vmul.f32 %v1664, %v1719
          %v1736 = vmul.f32 %v1667, %v1719
          %v1737 = vmul.f32 %v1670, %v1719
          %v1738 = vmul.f32 %v1673, %v1719
          %v1739 = vmul.f32 %v1676, %v1719
          %v1740 = vmul.f32 %v1679, %v1719
          %v1741 = vmul.f32 %v1682, %v1719
          %v1742 = vmul.f32 %v1685, %v1719
          %v1743 = vmul.f32 %v1688, %v1719
          %v1744 = vmul.f32 %v1691, %v1719
          %v1745 = vmul.f32 %v1694, %v1719
          %v1746 = vmul.f32 %v1697, %v1719
          %v1747 = vmul.f32 %v1700, %v1719
          %v1748 = vmul.f32 %v1703, %v1719
          %v1749 = vmul.f32 %v1706, %v1719
          %v1750 = vmul.f32 %v1709, %v1719
          %v1751 = vmul.f32 %v1712, %v1719
          %v1752 = vsub.f32 %v1537, %v1720
          %v1753 = vsub.f32 %v1539, %v1721
          %v1754 = vsub.f32 %v1542, %v1722
          %v1755 = vsub.f32 %v1544, %v1723
          %v1756 = vsub.f32 %v1547, %v1724
          %v1757 = vsub.f32 %v1549, %v1725
          %v1758 = vsub.f32 %v1552, %v1726
          %v1759 = vsub.f32 %v1554, %v1727
          %v1760 = vsub.f32 %v1557, %v1728
          %v1761 = vsub.f32 %v1559, %v1729
          %v1762 = vsub.f32 %v1562, %v1730
          %v1763 = vsub.f32 %v1564, %v1731
          %v1764 = vsub.f32 %v1567, %v1732
          %v1765 = vsub.f32 %v1569, %v1733
          %v1766 = vsub.f32 %v1572, %v1734
          %v1767 = vsub.f32 %v1574, %v1735
          %v1768 = vsub.f32 %v1577, %v1736
          %v1769 = vsub.f32 %v1579, %v1737
          %v1770 = vsub.f32 %v1582, %v1738
          %v1771 = vsub.f32 %v1584, %v1739
          %v1772 = vsub.f32 %v1587, %v1740
          %v1773 = vsub.f32 %v1589, %v1741
          %v1774 = vsub.f32 %v1592, %v1742
          %v1775 = vsub.f32 %v1594, %v1743
          %v1776 = vsub.f32 %v1597, %v1744
          %v1777 = vsub.f32 %v1599, %v1745
          %v1778 = vsub.f32 %v1602, %v1746
          %v1779 = vsub.f32 %v1604, %v1747
          %v1780 = vsub.f32 %v1607, %v1748
          %v1781 = vsub.f32 %v1609, %v1749
          %v1782 = vsub.f32 %v1612, %v1750
          %v1783 = vsub.f32 %v1614, %v1751
          %v1784 = vmul.f32 %v1752, %v1752
          %v1785 = vmul.f32 %v1753, %v1753
          %v1786 = vmul.f32 %v1754, %v1754
          %v1787 = vmul.f32 %v1755, %v1755
          %v1788 = vmul.f32 %v1756, %v1756
          %v1789 = vmul.f32 %v1757, %v1757
          %v1790 = vmul.f32 %v1758, %v1758
          %v1791 = vmul.f32 %v1759, %v1759
          %v1792 = vmul.f32 %v1760, %v1760
          %v1793 = vmul.f32 %v1761, %v1761
          %v1794 = vmul.f32 %v1762, %v1762
          %v1795 = vmul.f32 %v1763, %v1763
          %v1796 = vmul.f32 %v1764, %v1764
          %v1797 = vmul.f32 %v1765, %v1765
          %v1798 = vmul.f32 %v1766, %v1766
          %v1799 = vmul.f32 %v1767, %v1767
          %v1800 = vmul.f32 %v1768, %v1768
          %v1801 = vmul.f32 %v1769, %v1769
          %v1802 = vmul.f32 %v1770, %v1770
          %v1803 = vmul.f32 %v1771, %v1771
          %v1804 = vmul.f32 %v1772, %v1772
          %v1805 = vmul.f32 %v1773, %v1773
          %v1806 = vmul.f32 %v1774, %v1774
          %v1807 = vmul.f32 %v1775, %v1775
          %v1808 = vmul.f32 %v1776, %v1776
          %v1809 = vmul.f32 %v1777, %v1777
          %v1810 = vmul.f32 %v1778, %v1778
          %v1811 = vmul.f32 %v1779, %v1779
          %v1812 = vmul.f32 %v1780, %v1780
          %v1813 = vmul.f32 %v1781, %v1781
          %v1814 = vmul.f32 %v1782, %v1782
          %v1815 = vmul.f32 %v1783, %v1783
          %v1816 = vsel %vm1616, %v1784, 0.0
          %1817 = vadd.xlane.f32.xlu0 %v1816
          %v1818 = vpop.xlane.xlu0 %1817
          %v1819 = vsel %vm1616, %v1785, 0.0
          %1820 = vadd.xlane.f32.xlu0 %v1819
          %v1821 = vpop.xlane.xlu0 %1820
          %v1822 = vsel %vm1616, %v1786, 0.0
          %1823 = vadd.xlane.f32.xlu0 %v1822
          %v1824 = vpop.xlane.xlu0 %1823
          %v1825 = vsel %vm1616, %v1787, 0.0
          %1826 = vadd.xlane.f32.xlu0 %v1825
          %v1827 = vpop.xlane.xlu0 %1826
          %v1828 = vsel %vm1616, %v1788, 0.0
          %1829 = vadd.xlane.f32.xlu0 %v1828
          %v1830 = vpop.xlane.xlu0 %1829
          %v1831 = vsel %vm1616, %v1789, 0.0
          %1832 = vadd.xlane.f32.xlu0 %v1831
          %v1833 = vpop.xlane.xlu0 %1832
          %v1834 = vsel %vm1616, %v1790, 0.0
          %1835 = vadd.xlane.f32.xlu0 %v1834
          %v1836 = vpop.xlane.xlu0 %1835
          %v1837 = vsel %vm1616, %v1791, 0.0
          %1838 = vadd.xlane.f32.xlu0 %v1837
          %v1839 = vpop.xlane.xlu0 %1838
          %v1840 = vsel %vm1616, %v1792, 0.0
          %1841 = vadd.xlane.f32.xlu0 %v1840
          %v1842 = vpop.xlane.xlu0 %1841
          %v1843 = vsel %vm1616, %v1793, 0.0
          %1844 = vadd.xlane.f32.xlu0 %v1843
          %v1845 = vpop.xlane.xlu0 %1844
          %v1846 = vsel %vm1616, %v1794, 0.0
          %1847 = vadd.xlane.f32.xlu0 %v1846
          %v1848 = vpop.xlane.xlu0 %1847
          %v1849 = vsel %vm1616, %v1795, 0.0
          %1850 = vadd.xlane.f32.xlu0 %v1849
          %v1851 = vpop.xlane.xlu0 %1850
          %v1852 = vsel %vm1616, %v1796, 0.0
          %1853 = vadd.xlane.f32.xlu0 %v1852
          %v1854 = vpop.xlane.xlu0 %1853
          %v1855 = vsel %vm1616, %v1797, 0.0
          %1856 = vadd.xlane.f32.xlu0 %v1855
          %v1857 = vpop.xlane.xlu0 %1856
          %v1858 = vsel %vm1616, %v1798, 0.0
          %1859 = vadd.xlane.f32.xlu0 %v1858
          %v1860 = vpop.xlane.xlu0 %1859
          %v1861 = vsel %vm1616, %v1799, 0.0
          %1862 = vadd.xlane.f32.xlu0 %v1861
          %v1863 = vpop.xlane.xlu0 %1862
          %v1864 = vsel %vm1616, %v1800, 0.0
          %1865 = vadd.xlane.f32.xlu0 %v1864
          %v1866 = vpop.xlane.xlu0 %1865
          %v1867 = vsel %vm1616, %v1801, 0.0
          %1868 = vadd.xlane.f32.xlu0 %v1867
          %v1869 = vpop.xlane.xlu0 %1868
          %v1870 = vsel %vm1616, %v1802, 0.0
          %1871 = vadd.xlane.f32.xlu0 %v1870
          %v1872 = vpop.xlane.xlu0 %1871
          %v1873 = vsel %vm1616, %v1803, 0.0
          %1874 = vadd.xlane.f32.xlu0 %v1873
          %v1875 = vpop.xlane.xlu0 %1874
          %v1876 = vsel %vm1616, %v1804, 0.0
          %1877 = vadd.xlane.f32.xlu0 %v1876
          %v1878 = vpop.xlane.xlu0 %1877
          %v1879 = vsel %vm1616, %v1805, 0.0
          %1880 = vadd.xlane.f32.xlu0 %v1879
          %v1881 = vpop.xlane.xlu0 %1880
          %v1882 = vsel %vm1616, %v1806, 0.0
          %1883 = vadd.xlane.f32.xlu0 %v1882
          %v1884 = vpop.xlane.xlu0 %1883
          %v1885 = vsel %vm1616, %v1807, 0.0
          %1886 = vadd.xlane.f32.xlu0 %v1885
          %v1887 = vpop.xlane.xlu0 %1886
          %v1888 = vsel %vm1616, %v1808, 0.0
          %1889 = vadd.xlane.f32.xlu0 %v1888
          %v1890 = vpop.xlane.xlu0 %1889
          %v1891 = vsel %vm1616, %v1809, 0.0
          %1892 = vadd.xlane.f32.xlu0 %v1891
          %v1893 = vpop.xlane.xlu0 %1892
          %v1894 = vsel %vm1616, %v1810, 0.0
          %1895 = vadd.xlane.f32.xlu0 %v1894
          %v1896 = vpop.xlane.xlu0 %1895
          %v1897 = vsel %vm1616, %v1811, 0.0
          %1898 = vadd.xlane.f32.xlu0 %v1897
          %v1899 = vpop.xlane.xlu0 %1898
          %v1900 = vsel %vm1616, %v1812, 0.0
          %1901 = vadd.xlane.f32.xlu0 %v1900
          %v1902 = vpop.xlane.xlu0 %1901
          %v1903 = vsel %vm1616, %v1813, 0.0
          %1904 = vadd.xlane.f32.xlu0 %v1903
          %v1905 = vpop.xlane.xlu0 %1904
          %v1906 = vsel %vm1616, %v1814, 0.0
          %1907 = vadd.xlane.f32.xlu0 %v1906
          %v1908 = vpop.xlane.xlu0 %1907
          %v1909 = vsel %vm1616, %v1815, 0.0
          %1910 = vadd.xlane.f32.xlu0 %v1909
          %v1911 = vpop.xlane.xlu0 %1910
          %v1912 = vmul.f32 %v1818, %v1719
          %v1913 = vmul.f32 %v1821, %v1719
          %v1914 = vmul.f32 %v1824, %v1719
          %v1915 = vmul.f32 %v1827, %v1719
          %v1916 = vmul.f32 %v1830, %v1719
          %v1917 = vmul.f32 %v1833, %v1719
          %v1918 = vmul.f32 %v1836, %v1719
          %v1919 = vmul.f32 %v1839, %v1719
          %v1920 = vmul.f32 %v1842, %v1719
          %v1921 = vmul.f32 %v1845, %v1719
          %v1922 = vmul.f32 %v1848, %v1719
          %v1923 = vmul.f32 %v1851, %v1719
          %v1924 = vmul.f32 %v1854, %v1719
          %v1925 = vmul.f32 %v1857, %v1719
          %v1926 = vmul.f32 %v1860, %v1719
          %v1927 = vmul.f32 %v1863, %v1719
          %v1928 = vmul.f32 %v1866, %v1719
          %v1929 = vmul.f32 %v1869, %v1719
          %v1930 = vmul.f32 %v1872, %v1719
          %v1931 = vmul.f32 %v1875, %v1719
          %v1932 = vmul.f32 %v1878, %v1719
          %v1933 = vmul.f32 %v1881, %v1719
          %v1934 = vmul.f32 %v1884, %v1719
          %v1935 = vmul.f32 %v1887, %v1719
          %v1936 = vmul.f32 %v1890, %v1719
          %v1937 = vmul.f32 %v1893, %v1719
          %v1938 = vmul.f32 %v1896, %v1719
          %v1939 = vmul.f32 %v1899, %v1719
          %v1940 = vmul.f32 %v1902, %v1719
          %v1941 = vmul.f32 %v1905, %v1719
          %v1942 = vmul.f32 %v1908, %v1719
          %v1943 = vmul.f32 %v1911, %v1719
          %v1944 = vadd.f32 %v1912, 1e-06
          %v1945 = vadd.f32 %v1913, 1e-06
          %v1946 = vadd.f32 %v1914, 1e-06
          %v1947 = vadd.f32 %v1915, 1e-06
          %v1948 = vadd.f32 %v1916, 1e-06
          %v1949 = vadd.f32 %v1917, 1e-06
          %v1950 = vadd.f32 %v1918, 1e-06
          %v1951 = vadd.f32 %v1919, 1e-06
          %v1952 = vadd.f32 %v1920, 1e-06
          %v1953 = vadd.f32 %v1921, 1e-06
          %v1954 = vadd.f32 %v1922, 1e-06
          %v1955 = vadd.f32 %v1923, 1e-06
          %v1956 = vadd.f32 %v1924, 1e-06
          %v1957 = vadd.f32 %v1925, 1e-06
          %v1958 = vadd.f32 %v1926, 1e-06
          %v1959 = vadd.f32 %v1927, 1e-06
          %v1960 = vadd.f32 %v1928, 1e-06
          %v1961 = vadd.f32 %v1929, 1e-06
          %v1962 = vadd.f32 %v1930, 1e-06
          %v1963 = vadd.f32 %v1931, 1e-06
          %v1964 = vadd.f32 %v1932, 1e-06
          %v1965 = vadd.f32 %v1933, 1e-06
          %v1966 = vadd.f32 %v1934, 1e-06
          %v1967 = vadd.f32 %v1935, 1e-06
          %v1968 = vadd.f32 %v1936, 1e-06
          %v1969 = vadd.f32 %v1937, 1e-06
          %v1970 = vadd.f32 %v1938, 1e-06
          %v1971 = vadd.f32 %v1939, 1e-06
          %v1972 = vadd.f32 %v1940, 1e-06
          %v1973 = vadd.f32 %v1941, 1e-06
          %v1974 = vadd.f32 %v1942, 1e-06
          %v1975 = vadd.f32 %v1943, 1e-06
          %v1976 = vrsqrt.pop %v1944
          %v1977 = vmul.f32 %v1976, %v1944
          %v1978 = vmul.f32 %v1977, %v1976
          %v1979 = vmul.f32 0.5, %v1978
          %v1980 = vsub.f32 1.5, %v1979
          %v1981 = vmul.f32 %v1976, %v1980
          %vm1982 = vweird.f32 %v1944
          %vm1983 = vweird.f32 %v1976
          %vm1984 = vmor %vm1982, %vm1983
          %v1985 = vsel %vm1984, %v1976, %v1981
          %v1986 = vrsqrt.pop %v1945
          %v1987 = vmul.f32 %v1986, %v1945
          %v1988 = vmul.f32 %v1987, %v1986
          %v1989 = vmul.f32 0.5, %v1988
          %v1990 = vsub.f32 1.5, %v1989
          %v1991 = vmul.f32 %v1986, %v1990
          %vm1992 = vweird.f32 %v1945
          %vm1993 = vweird.f32 %v1986
          %vm1994 = vmor %vm1992, %vm1993
          %v1995 = vsel %vm1994, %v1986, %v1991
          %v1996 = vrsqrt.pop %v1946
          %v1997 = vmul.f32 %v1996, %v1946
          %v1998 = vmul.f32 %v1997, %v1996
          %v1999 = vmul.f32 0.5, %v1998
          %v2000 = vsub.f32 1.5, %v1999
          %v2001 = vmul.f32 %v1996, %v2000
          %vm2002 = vweird.f32 %v1946
          %vm2003 = vweird.f32 %v1996
          %vm2004 = vmor %vm2002, %vm2003
          %v2005 = vsel %vm2004, %v1996, %v2001
          %v2006 = vrsqrt.pop %v1947
          %v2007 = vmul.f32 %v2006, %v1947
          %v2008 = vmul.f32 %v2007, %v2006
          %v2009 = vmul.f32 0.5, %v2008
          %v2010 = vsub.f32 1.5, %v2009
          %v2011 = vmul.f32 %v2006, %v2010
          %vm2012 = vweird.f32 %v1947
          %vm2013 = vweird.f32 %v2006
          %vm2014 = vmor %vm2012, %vm2013
          %v2015 = vsel %vm2014, %v2006, %v2011
          %v2016 = vrsqrt.pop %v1948
          %v2017 = vmul.f32 %v2016, %v1948
          %v2018 = vmul.f32 %v2017, %v2016
          %v2019 = vmul.f32 0.5, %v2018
          %v2020 = vsub.f32 1.5, %v2019
          %v2021 = vmul.f32 %v2016, %v2020
          %vm2022 = vweird.f32 %v1948
          %vm2023 = vweird.f32 %v2016
          %vm2024 = vmor %vm2022, %vm2023
          %v2025 = vsel %vm2024, %v2016, %v2021
          %v2026 = vrsqrt.pop %v1949
          %v2027 = vmul.f32 %v2026, %v1949
          %v2028 = vmul.f32 %v2027, %v2026
          %v2029 = vmul.f32 0.5, %v2028
          %v2030 = vsub.f32 1.5, %v2029
          %v2031 = vmul.f32 %v2026, %v2030
          %vm2032 = vweird.f32 %v1949
          %vm2033 = vweird.f32 %v2026
          %vm2034 = vmor %vm2032, %vm2033
          %v2035 = vsel %vm2034, %v2026, %v2031
          %v2036 = vrsqrt.pop %v1950
          %v2037 = vmul.f32 %v2036, %v1950
          %v2038 = vmul.f32 %v2037, %v2036
          %v2039 = vmul.f32 0.5, %v2038
          %v2040 = vsub.f32 1.5, %v2039
          %v2041 = vmul.f32 %v2036, %v2040
          %vm2042 = vweird.f32 %v1950
          %vm2043 = vweird.f32 %v2036
          %vm2044 = vmor %vm2042, %vm2043
          %v2045 = vsel %vm2044, %v2036, %v2041
          %v2046 = vrsqrt.pop %v1951
          %v2047 = vmul.f32 %v2046, %v1951
          %v2048 = vmul.f32 %v2047, %v2046
          %v2049 = vmul.f32 0.5, %v2048
          %v2050 = vsub.f32 1.5, %v2049
          %v2051 = vmul.f32 %v2046, %v2050
          %vm2052 = vweird.f32 %v1951
          %vm2053 = vweird.f32 %v2046
          %vm2054 = vmor %vm2052, %vm2053
          %v2055 = vsel %vm2054, %v2046, %v2051
          %v2056 = vrsqrt.pop %v1952
          %v2057 = vmul.f32 %v2056, %v1952
          %v2058 = vmul.f32 %v2057, %v2056
          %v2059 = vmul.f32 0.5, %v2058
          %v2060 = vsub.f32 1.5, %v2059
          %v2061 = vmul.f32 %v2056, %v2060
          %vm2062 = vweird.f32 %v1952
          %vm2063 = vweird.f32 %v2056
          %vm2064 = vmor %vm2062, %vm2063
          %v2065 = vsel %vm2064, %v2056, %v2061
          %v2066 = vrsqrt.pop %v1953
          %v2067 = vmul.f32 %v2066, %v1953
          %v2068 = vmul.f32 %v2067, %v2066
          %v2069 = vmul.f32 0.5, %v2068
          %v2070 = vsub.f32 1.5, %v2069
          %v2071 = vmul.f32 %v2066, %v2070
          %vm2072 = vweird.f32 %v1953
          %vm2073 = vweird.f32 %v2066
          %vm2074 = vmor %vm2072, %vm2073
          %v2075 = vsel %vm2074, %v2066, %v2071
          %v2076 = vrsqrt.pop %v1954
          %v2077 = vmul.f32 %v2076, %v1954
          %v2078 = vmul.f32 %v2077, %v2076
          %v2079 = vmul.f32 0.5, %v2078
          %v2080 = vsub.f32 1.5, %v2079
          %v2081 = vmul.f32 %v2076, %v2080
          %vm2082 = vweird.f32 %v1954
          %vm2083 = vweird.f32 %v2076
          %vm2084 = vmor %vm2082, %vm2083
          %v2085 = vsel %vm2084, %v2076, %v2081
          %v2086 = vrsqrt.pop %v1955
          %v2087 = vmul.f32 %v2086, %v1955
          %v2088 = vmul.f32 %v2087, %v2086
          %v2089 = vmul.f32 0.5, %v2088
          %v2090 = vsub.f32 1.5, %v2089
          %v2091 = vmul.f32 %v2086, %v2090
          %vm2092 = vweird.f32 %v1955
          %vm2093 = vweird.f32 %v2086
          %vm2094 = vmor %vm2092, %vm2093
          %v2095 = vsel %vm2094, %v2086, %v2091
          %v2096 = vrsqrt.pop %v1956
          %v2097 = vmul.f32 %v2096, %v1956
          %v2098 = vmul.f32 %v2097, %v2096
          %v2099 = vmul.f32 0.5, %v2098
          %v2100 = vsub.f32 1.5, %v2099
          %v2101 = vmul.f32 %v2096, %v2100
          %vm2102 = vweird.f32 %v1956
          %vm2103 = vweird.f32 %v2096
          %vm2104 = vmor %vm2102, %vm2103
          %v2105 = vsel %vm2104, %v2096, %v2101
          %v2106 = vrsqrt.pop %v1957
          %v2107 = vmul.f32 %v2106, %v1957
          %v2108 = vmul.f32 %v2107, %v2106
          %v2109 = vmul.f32 0.5, %v2108
          %v2110 = vsub.f32 1.5, %v2109
          %v2111 = vmul.f32 %v2106, %v2110
          %vm2112 = vweird.f32 %v1957
          %vm2113 = vweird.f32 %v2106
          %vm2114 = vmor %vm2112, %vm2113
          %v2115 = vsel %vm2114, %v2106, %v2111
          %v2116 = vrsqrt.pop %v1958
          %v2117 = vmul.f32 %v2116, %v1958
          %v2118 = vmul.f32 %v2117, %v2116
          %v2119 = vmul.f32 0.5, %v2118
          %v2120 = vsub.f32 1.5, %v2119
          %v2121 = vmul.f32 %v2116, %v2120
          %vm2122 = vweird.f32 %v1958
          %vm2123 = vweird.f32 %v2116
          %vm2124 = vmor %vm2122, %vm2123
          %v2125 = vsel %vm2124, %v2116, %v2121
          %v2126 = vrsqrt.pop %v1959
          %v2127 = vmul.f32 %v2126, %v1959
          %v2128 = vmul.f32 %v2127, %v2126
          %v2129 = vmul.f32 0.5, %v2128
          %v2130 = vsub.f32 1.5, %v2129
          %v2131 = vmul.f32 %v2126, %v2130
          %vm2132 = vweird.f32 %v1959
          %vm2133 = vweird.f32 %v2126
          %vm2134 = vmor %vm2132, %vm2133
          %v2135 = vsel %vm2134, %v2126, %v2131
          %v2136 = vrsqrt.pop %v1960
          %v2137 = vmul.f32 %v2136, %v1960
          %v2138 = vmul.f32 %v2137, %v2136
          %v2139 = vmul.f32 0.5, %v2138
          %v2140 = vsub.f32 1.5, %v2139
          %v2141 = vmul.f32 %v2136, %v2140
          %vm2142 = vweird.f32 %v1960
          %vm2143 = vweird.f32 %v2136
          %vm2144 = vmor %vm2142, %vm2143
          %v2145 = vsel %vm2144, %v2136, %v2141
          %v2146 = vrsqrt.pop %v1961
          %v2147 = vmul.f32 %v2146, %v1961
          %v2148 = vmul.f32 %v2147, %v2146
          %v2149 = vmul.f32 0.5, %v2148
          %v2150 = vsub.f32 1.5, %v2149
          %v2151 = vmul.f32 %v2146, %v2150
          %vm2152 = vweird.f32 %v1961
          %vm2153 = vweird.f32 %v2146
          %vm2154 = vmor %vm2152, %vm2153
          %v2155 = vsel %vm2154, %v2146, %v2151
          %v2156 = vrsqrt.pop %v1962
          %v2157 = vmul.f32 %v2156, %v1962
          %v2158 = vmul.f32 %v2157, %v2156
          %v2159 = vmul.f32 0.5, %v2158
          %v2160 = vsub.f32 1.5, %v2159
          %v2161 = vmul.f32 %v2156, %v2160
          %vm2162 = vweird.f32 %v1962
          %vm2163 = vweird.f32 %v2156
          %vm2164 = vmor %vm2162, %vm2163
          %v2165 = vsel %vm2164, %v2156, %v2161
          %v2166 = vrsqrt.pop %v1963
          %v2167 = vmul.f32 %v2166, %v1963
          %v2168 = vmul.f32 %v2167, %v2166
          %v2169 = vmul.f32 0.5, %v2168
          %v2170 = vsub.f32 1.5, %v2169
          %v2171 = vmul.f32 %v2166, %v2170
          %vm2172 = vweird.f32 %v1963
          %vm2173 = vweird.f32 %v2166
          %vm2174 = vmor %vm2172, %vm2173
          %v2175 = vsel %vm2174, %v2166, %v2171
          %v2176 = vrsqrt.pop %v1964
          %v2177 = vmul.f32 %v2176, %v1964
          %v2178 = vmul.f32 %v2177, %v2176
          %v2179 = vmul.f32 0.5, %v2178
          %v2180 = vsub.f32 1.5, %v2179
          %v2181 = vmul.f32 %v2176, %v2180
          %vm2182 = vweird.f32 %v1964
          %vm2183 = vweird.f32 %v2176
          %vm2184 = vmor %vm2182, %vm2183
          %v2185 = vsel %vm2184, %v2176, %v2181
          %v2186 = vrsqrt.pop %v1965
          %v2187 = vmul.f32 %v2186, %v1965
          %v2188 = vmul.f32 %v2187, %v2186
          %v2189 = vmul.f32 0.5, %v2188
          %v2190 = vsub.f32 1.5, %v2189
          %v2191 = vmul.f32 %v2186, %v2190
          %vm2192 = vweird.f32 %v1965
          %vm2193 = vweird.f32 %v2186
          %vm2194 = vmor %vm2192, %vm2193
          %v2195 = vsel %vm2194, %v2186, %v2191
          %v2196 = vrsqrt.pop %v1966
          %v2197 = vmul.f32 %v2196, %v1966
          %v2198 = vmul.f32 %v2197, %v2196
          %v2199 = vmul.f32 0.5, %v2198
          %v2200 = vsub.f32 1.5, %v2199
          %v2201 = vmul.f32 %v2196, %v2200
          %vm2202 = vweird.f32 %v1966
          %vm2203 = vweird.f32 %v2196
          %vm2204 = vmor %vm2202, %vm2203
          %v2205 = vsel %vm2204, %v2196, %v2201
          %v2206 = vrsqrt.pop %v1967
          %v2207 = vmul.f32 %v2206, %v1967
          %v2208 = vmul.f32 %v2207, %v2206
          %v2209 = vmul.f32 0.5, %v2208
          %v2210 = vsub.f32 1.5, %v2209
          %v2211 = vmul.f32 %v2206, %v2210
          %vm2212 = vweird.f32 %v1967
          %vm2213 = vweird.f32 %v2206
          %vm2214 = vmor %vm2212, %vm2213
          %v2215 = vsel %vm2214, %v2206, %v2211
          %v2216 = vrsqrt.pop %v1968
          %v2217 = vmul.f32 %v2216, %v1968
          %v2218 = vmul.f32 %v2217, %v2216
          %v2219 = vmul.f32 0.5, %v2218
          %v2220 = vsub.f32 1.5, %v2219
          %v2221 = vmul.f32 %v2216, %v2220
          %vm2222 = vweird.f32 %v1968
          %vm2223 = vweird.f32 %v2216
          %vm2224 = vmor %vm2222, %vm2223
          %v2225 = vsel %vm2224, %v2216, %v2221
          %v2226 = vrsqrt.pop %v1969
          %v2227 = vmul.f32 %v2226, %v1969
          %v2228 = vmul.f32 %v2227, %v2226
          %v2229 = vmul.f32 0.5, %v2228
          %v2230 = vsub.f32 1.5, %v2229
          %v2231 = vmul.f32 %v2226, %v2230
          %vm2232 = vweird.f32 %v1969
          %vm2233 = vweird.f32 %v2226
          %vm2234 = vmor %vm2232, %vm2233
          %v2235 = vsel %vm2234, %v2226, %v2231
          %v2236 = vrsqrt.pop %v1970
          %v2237 = vmul.f32 %v2236, %v1970
          %v2238 = vmul.f32 %v2237, %v2236
          %v2239 = vmul.f32 0.5, %v2238
          %v2240 = vsub.f32 1.5, %v2239
          %v2241 = vmul.f32 %v2236, %v2240
          %vm2242 = vweird.f32 %v1970
          %vm2243 = vweird.f32 %v2236
          %vm2244 = vmor %vm2242, %vm2243
          %v2245 = vsel %vm2244, %v2236, %v2241
          %v2246 = vrsqrt.pop %v1971
          %v2247 = vmul.f32 %v2246, %v1971
          %v2248 = vmul.f32 %v2247, %v2246
          %v2249 = vmul.f32 0.5, %v2248
          %v2250 = vsub.f32 1.5, %v2249
          %v2251 = vmul.f32 %v2246, %v2250
          %vm2252 = vweird.f32 %v1971
          %vm2253 = vweird.f32 %v2246
          %vm2254 = vmor %vm2252, %vm2253
          %v2255 = vsel %vm2254, %v2246, %v2251
          %v2256 = vrsqrt.pop %v1972
          %v2257 = vmul.f32 %v2256, %v1972
          %v2258 = vmul.f32 %v2257, %v2256
          %v2259 = vmul.f32 0.5, %v2258
          %v2260 = vsub.f32 1.5, %v2259
          %v2261 = vmul.f32 %v2256, %v2260
          %vm2262 = vweird.f32 %v1972
          %vm2263 = vweird.f32 %v2256
          %vm2264 = vmor %vm2262, %vm2263
          %v2265 = vsel %vm2264, %v2256, %v2261
          %v2266 = vrsqrt.pop %v1973
          %v2267 = vmul.f32 %v2266, %v1973
          %v2268 = vmul.f32 %v2267, %v2266
          %v2269 = vmul.f32 0.5, %v2268
          %v2270 = vsub.f32 1.5, %v2269
          %v2271 = vmul.f32 %v2266, %v2270
          %vm2272 = vweird.f32 %v1973
          %vm2273 = vweird.f32 %v2266
          %vm2274 = vmor %vm2272, %vm2273
          %v2275 = vsel %vm2274, %v2266, %v2271
          %v2276 = vrsqrt.pop %v1974
          %v2277 = vmul.f32 %v2276, %v1974
          %v2278 = vmul.f32 %v2277, %v2276
          %v2279 = vmul.f32 0.5, %v2278
          %v2280 = vsub.f32 1.5, %v2279
          %v2281 = vmul.f32 %v2276, %v2280
          %vm2282 = vweird.f32 %v1974
          %vm2283 = vweird.f32 %v2276
          %vm2284 = vmor %vm2282, %vm2283
          %v2285 = vsel %vm2284, %v2276, %v2281
          %v2286 = vrsqrt.pop %v1975
          %v2287 = vmul.f32 %v2286, %v1975
          %v2288 = vmul.f32 %v2287, %v2286
          %v2289 = vmul.f32 0.5, %v2288
          %v2290 = vsub.f32 1.5, %v2289
          %v2291 = vmul.f32 %v2286, %v2290
          %vm2292 = vweird.f32 %v1975
          %vm2293 = vweird.f32 %v2286
          %vm2294 = vmor %vm2292, %vm2293
          %v2295 = vsel %vm2294, %v2286, %v2291
          %v2296 = vmul.f32 %v1752, %v1985
          %v2297 = vmul.f32 %v1753, %v1995
          %v2298 = vmul.f32 %v1754, %v2005
          %v2299 = vmul.f32 %v1755, %v2015
          %v2300 = vmul.f32 %v1756, %v2025
          %v2301 = vmul.f32 %v1757, %v2035
          %v2302 = vmul.f32 %v1758, %v2045
          %v2303 = vmul.f32 %v1759, %v2055
          %v2304 = vmul.f32 %v1760, %v2065
          %v2305 = vmul.f32 %v1761, %v2075
          %v2306 = vmul.f32 %v1762, %v2085
          %v2307 = vmul.f32 %v1763, %v2095
          %v2308 = vmul.f32 %v1764, %v2105
          %v2309 = vmul.f32 %v1765, %v2115
          %v2310 = vmul.f32 %v1766, %v2125
          %v2311 = vmul.f32 %v1767, %v2135
          %v2312 = vmul.f32 %v1768, %v2145
          %v2313 = vmul.f32 %v1769, %v2155
          %v2314 = vmul.f32 %v1770, %v2165
          %v2315 = vmul.f32 %v1771, %v2175
          %v2316 = vmul.f32 %v1772, %v2185
          %v2317 = vmul.f32 %v1773, %v2195
          %v2318 = vmul.f32 %v1774, %v2205
          %v2319 = vmul.f32 %v1775, %v2215
          %v2320 = vmul.f32 %v1776, %v2225
          %v2321 = vmul.f32 %v1777, %v2235
          %v2322 = vmul.f32 %v1778, %v2245
          %v2323 = vmul.f32 %v1779, %v2255
          %v2324 = vmul.f32 %v1780, %v2265
          %v2325 = vmul.f32 %v1781, %v2275
          %v2326 = vmul.f32 %v1782, %v2285
          %v2327 = vmul.f32 %v1783, %v2295
          %v2328 = vld [vmem:[%s3] sm:$0x1]
          %v2330 = vperm.slane %v2328, 0
          %v2332 = vmul.f32 %v2296, %v2330
          %v2333 = vmul.f32 %v2297, %v2330
          %v2334 = vmul.f32 %v2298, %v2330
          %v2335 = vmul.f32 %v2299, %v2330
          %v2336 = vmul.f32 %v2300, %v2330
          %v2337 = vmul.f32 %v2301, %v2330
          %v2338 = vmul.f32 %v2302, %v2330
          %v2339 = vmul.f32 %v2303, %v2330
          %v2340 = vmul.f32 %v2304, %v2330
          %v2341 = vmul.f32 %v2305, %v2330
          %v2342 = vmul.f32 %v2306, %v2330
          %v2343 = vmul.f32 %v2307, %v2330
          %v2344 = vmul.f32 %v2308, %v2330
          %v2345 = vmul.f32 %v2309, %v2330
          %v2346 = vmul.f32 %v2310, %v2330
          %v2347 = vmul.f32 %v2311, %v2330
          %v2348 = vmul.f32 %v2312, %v2330
          %v2349 = vmul.f32 %v2313, %v2330
          %v2350 = vmul.f32 %v2314, %v2330
          %v2351 = vmul.f32 %v2315, %v2330
          %v2352 = vmul.f32 %v2316, %v2330
          %v2353 = vmul.f32 %v2317, %v2330
          %v2354 = vmul.f32 %v2318, %v2330
          %v2355 = vmul.f32 %v2319, %v2330
          %v2356 = vmul.f32 %v2320, %v2330
          %v2357 = vmul.f32 %v2321, %v2330
          %v2358 = vmul.f32 %v2322, %v2330
          %v2359 = vmul.f32 %v2323, %v2330
          %v2360 = vmul.f32 %v2324, %v2330
          %v2361 = vmul.f32 %v2325, %v2330
          %v2362 = vmul.f32 %v2326, %v2330
          %v2363 = vmul.f32 %v2327, %v2330
          %v2364 = vsel %vm1616, %v2332, 0.0
          %2365 = vadd.xlane.f32.xlu0 %v2364
          %v2366 = vpop.xlane.xlu0 %2365
          %v2367 = vsel %vm1616, %v2333, 0.0
          %2368 = vadd.xlane.f32.xlu0 %v2367
          %v2369 = vpop.xlane.xlu0 %2368
          %v2370 = vsel %vm1616, %v2334, 0.0
          %2371 = vadd.xlane.f32.xlu0 %v2370
          %v2372 = vpop.xlane.xlu0 %2371
          %v2373 = vsel %vm1616, %v2335, 0.0
          %2374 = vadd.xlane.f32.xlu0 %v2373
          %v2375 = vpop.xlane.xlu0 %2374
          %v2376 = vsel %vm1616, %v2336, 0.0
          %2377 = vadd.xlane.f32.xlu0 %v2376
          %v2378 = vpop.xlane.xlu0 %2377
          %v2379 = vsel %vm1616, %v2337, 0.0
          %2380 = vadd.xlane.f32.xlu0 %v2379
          %v2381 = vpop.xlane.xlu0 %2380
          %v2382 = vsel %vm1616, %v2338, 0.0
          %2383 = vadd.xlane.f32.xlu0 %v2382
          %v2384 = vpop.xlane.xlu0 %2383
          %v2385 = vsel %vm1616, %v2339, 0.0
          %2386 = vadd.xlane.f32.xlu0 %v2385
          %v2387 = vpop.xlane.xlu0 %2386
          %v2388 = vsel %vm1616, %v2340, 0.0
          %2389 = vadd.xlane.f32.xlu0 %v2388
          %v2390 = vpop.xlane.xlu0 %2389
          %v2391 = vsel %vm1616, %v2341, 0.0
          %2392 = vadd.xlane.f32.xlu0 %v2391
          %v2393 = vpop.xlane.xlu0 %2392
          %v2394 = vsel %vm1616, %v2342, 0.0
          %2395 = vadd.xlane.f32.xlu0 %v2394
          %v2396 = vpop.xlane.xlu0 %2395
          %v2397 = vsel %vm1616, %v2343, 0.0
          %2398 = vadd.xlane.f32.xlu0 %v2397
          %v2399 = vpop.xlane.xlu0 %2398
          %v2400 = vsel %vm1616, %v2344, 0.0
          %2401 = vadd.xlane.f32.xlu0 %v2400
          %v2402 = vpop.xlane.xlu0 %2401
          %v2403 = vsel %vm1616, %v2345, 0.0
          %2404 = vadd.xlane.f32.xlu0 %v2403
          %v2405 = vpop.xlane.xlu0 %2404
          %v2406 = vsel %vm1616, %v2346, 0.0
          %2407 = vadd.xlane.f32.xlu0 %v2406
          %v2408 = vpop.xlane.xlu0 %2407
          %v2409 = vsel %vm1616, %v2347, 0.0
          %2410 = vadd.xlane.f32.xlu0 %v2409
          %v2411 = vpop.xlane.xlu0 %2410
          %v2412 = vsel %vm1616, %v2348, 0.0
          %2413 = vadd.xlane.f32.xlu0 %v2412
          %v2414 = vpop.xlane.xlu0 %2413
          %v2415 = vsel %vm1616, %v2349, 0.0
          %2416 = vadd.xlane.f32.xlu0 %v2415
          %v2417 = vpop.xlane.xlu0 %2416
          %v2418 = vsel %vm1616, %v2350, 0.0
          %2419 = vadd.xlane.f32.xlu0 %v2418
          %v2420 = vpop.xlane.xlu0 %2419
          %v2421 = vsel %vm1616, %v2351, 0.0
          %2422 = vadd.xlane.f32.xlu0 %v2421
          %v2423 = vpop.xlane.xlu0 %2422
          %v2424 = vsel %vm1616, %v2352, 0.0
          %2425 = vadd.xlane.f32.xlu0 %v2424
          %v2426 = vpop.xlane.xlu0 %2425
          %v2427 = vsel %vm1616, %v2353, 0.0
          %2428 = vadd.xlane.f32.xlu0 %v2427
          %v2429 = vpop.xlane.xlu0 %2428
          %v2430 = vsel %vm1616, %v2354, 0.0
          %2431 = vadd.xlane.f32.xlu0 %v2430
          %v2432 = vpop.xlane.xlu0 %2431
          %v2433 = vsel %vm1616, %v2355, 0.0
          %2434 = vadd.xlane.f32.xlu0 %v2433
          %v2435 = vpop.xlane.xlu0 %2434
          %v2436 = vsel %vm1616, %v2356, 0.0
          %2437 = vadd.xlane.f32.xlu0 %v2436
          %v2438 = vpop.xlane.xlu0 %2437
          %v2439 = vsel %vm1616, %v2357, 0.0
          %2440 = vadd.xlane.f32.xlu0 %v2439
          %v2441 = vpop.xlane.xlu0 %2440
          %v2442 = vsel %vm1616, %v2358, 0.0
          %2443 = vadd.xlane.f32.xlu0 %v2442
          %v2444 = vpop.xlane.xlu0 %2443
          %v2445 = vsel %vm1616, %v2359, 0.0
          %2446 = vadd.xlane.f32.xlu0 %v2445
          %v2447 = vpop.xlane.xlu0 %2446
          %v2448 = vsel %vm1616, %v2360, 0.0
          %2449 = vadd.xlane.f32.xlu0 %v2448
          %v2450 = vpop.xlane.xlu0 %2449
          %v2451 = vsel %vm1616, %v2361, 0.0
          %2452 = vadd.xlane.f32.xlu0 %v2451
          %v2453 = vpop.xlane.xlu0 %2452
          %v2454 = vsel %vm1616, %v2362, 0.0
          %2455 = vadd.xlane.f32.xlu0 %v2454
          %v2456 = vpop.xlane.xlu0 %2455
          %v2457 = vsel %vm1616, %v2363, 0.0
          %2458 = vadd.xlane.f32.xlu0 %v2457
          %v2459 = vpop.xlane.xlu0 %2458
          %s2460 = sld [smem:[#allocation3]]
          %v2461 = vstv %s2460
          %v2462 = vadd.f32 %v2366, %v2461
          %v2463 = vadd.f32 %v2369, %v2461
          %v2464 = vadd.f32 %v2372, %v2461
          %v2465 = vadd.f32 %v2375, %v2461
          %v2466 = vadd.f32 %v2378, %v2461
          %v2467 = vadd.f32 %v2381, %v2461
          %v2468 = vadd.f32 %v2384, %v2461
          %v2469 = vadd.f32 %v2387, %v2461
          %v2470 = vadd.f32 %v2390, %v2461
          %v2471 = vadd.f32 %v2393, %v2461
          %v2472 = vadd.f32 %v2396, %v2461
          %v2473 = vadd.f32 %v2399, %v2461
          %v2474 = vadd.f32 %v2402, %v2461
          %v2475 = vadd.f32 %v2405, %v2461
          %v2476 = vadd.f32 %v2408, %v2461
          %v2477 = vadd.f32 %v2411, %v2461
          %v2478 = vadd.f32 %v2414, %v2461
          %v2479 = vadd.f32 %v2417, %v2461
          %v2480 = vadd.f32 %v2420, %v2461
          %v2481 = vadd.f32 %v2423, %v2461
          %v2482 = vadd.f32 %v2426, %v2461
          %v2483 = vadd.f32 %v2429, %v2461
          %v2484 = vadd.f32 %v2432, %v2461
          %v2485 = vadd.f32 %v2435, %v2461
          %v2486 = vadd.f32 %v2438, %v2461
          %v2487 = vadd.f32 %v2441, %v2461
          %v2488 = vadd.f32 %v2444, %v2461
          %v2489 = vadd.f32 %v2447, %v2461
          %v2490 = vadd.f32 %v2450, %v2461
          %v2491 = vadd.f32 %v2453, %v2461
          %v2492 = vadd.f32 %v2456, %v2461
          %v2493 = vadd.f32 %v2459, %v2461
          %v2494 = vld [vmem:[%s4] sm:$0xff]
          %v2495 = vld [vmem:[%s4 + $0x8] sm:$0xff]
          %v2496 = vld [vmem:[%s4 + $0x10] sm:$0xff]
          %v2497 = vld [vmem:[%s4 + $0x18] sm:$0xff]
          %v2498 = vld [vmem:[%s4 + $0x20] sm:$0xff]
          %v2499 = vld [vmem:[%s4 + $0x28] sm:$0xff]
          %v2500 = vld [vmem:[%s4 + $0x30] sm:$0xff]
          %v2501 = vld [vmem:[%s4 + $0x38] sm:$0xff]
          %v2502 = vld [vmem:[%s4 + $0x40] sm:$0xff]
          %v2503 = vld [vmem:[%s4 + $0x48] sm:$0xff]
          %v2504 = vld [vmem:[%s4 + $0x50] sm:$0xff]
          %v2505 = vld [vmem:[%s4 + $0x58] sm:$0xff]
          %v2506 = vld [vmem:[%s4 + $0x60] sm:$0xff]
          %v2507 = vld [vmem:[%s4 + $0x68] sm:$0xff]
          %v2508 = vld [vmem:[%s4 + $0x70] sm:$0xff]
          %v2509 = vld [vmem:[%s4 + $0x78] sm:$0xff]
          %v2510 = vld [vmem:[%s4 + $0x80] sm:$0xff]
          %v2511 = vld [vmem:[%s4 + $0x88] sm:$0xff]
          %v2512 = vld [vmem:[%s4 + $0x90] sm:$0xff]
          %v2513 = vld [vmem:[%s4 + $0x98] sm:$0xff]
          %v2514 = vld [vmem:[%s4 + $0xa0] sm:$0xff]
          %v2515 = vld [vmem:[%s4 + $0xa8] sm:$0xff]
          %v2516 = vld [vmem:[%s4 + $0xb0] sm:$0xff]
          %v2517 = vld [vmem:[%s4 + $0xb8] sm:$0xff]
          %v2518 = vld [vmem:[%s4 + $0xc0] sm:$0xff]
          %v2519 = vld [vmem:[%s4 + $0xc8] sm:$0xff]
          %v2520 = vld [vmem:[%s4 + $0xd0] sm:$0xff]
          %v2521 = vld [vmem:[%s4 + $0xd8] sm:$0xff]
          %v2522 = vld [vmem:[%s4 + $0xe0] sm:$0xff]
          %v2523 = vld [vmem:[%s4 + $0xe8] sm:$0xff]
          %v2524 = vld [vmem:[%s4 + $0xf0] sm:$0xff]
          %v2525 = vld [vmem:[%s4 + $0xf8] sm:$0xff]
          %v2526 = vunpack.c.l.bf16 %v2494
          %v2527 = vunpack.c.h.bf16 %v2494
          %v2528 = vunpack.c.l.bf16 %v2495
          %v2529 = vunpack.c.h.bf16 %v2495
          %v2530 = vunpack.c.l.bf16 %v2496
          %v2531 = vunpack.c.h.bf16 %v2496
          %v2532 = vunpack.c.l.bf16 %v2497
          %v2533 = vunpack.c.h.bf16 %v2497
          %v2534 = vunpack.c.l.bf16 %v2498
          %v2535 = vunpack.c.h.bf16 %v2498
          %v2536 = vunpack.c.l.bf16 %v2499
          %v2537 = vunpack.c.h.bf16 %v2499
          %v2538 = vunpack.c.l.bf16 %v2500
          %v2539 = vunpack.c.h.bf16 %v2500
          %v2540 = vunpack.c.l.bf16 %v2501
          %v2541 = vunpack.c.h.bf16 %v2501
          %v2542 = vunpack.c.l.bf16 %v2502
          %v2543 = vunpack.c.h.bf16 %v2502
          %v2544 = vunpack.c.l.bf16 %v2503
          %v2545 = vunpack.c.h.bf16 %v2503
          %v2546 = vunpack.c.l.bf16 %v2504
          %v2547 = vunpack.c.h.bf16 %v2504
          %v2548 = vunpack.c.l.bf16 %v2505
          %v2549 = vunpack.c.h.bf16 %v2505
          %v2550 = vunpack.c.l.bf16 %v2506
          %v2551 = vunpack.c.h.bf16 %v2506
          %v2552 = vunpack.c.l.bf16 %v2507
          %v2553 = vunpack.c.h.bf16 %v2507
          %v2554 = vunpack.c.l.bf16 %v2508
          %v2555 = vunpack.c.h.bf16 %v2508
          %v2556 = vunpack.c.l.bf16 %v2509
          %v2557 = vunpack.c.h.bf16 %v2509
          %v2558 = vunpack.c.l.bf16 %v2510
          %v2559 = vunpack.c.h.bf16 %v2510
          %v2560 = vunpack.c.l.bf16 %v2511
          %v2561 = vunpack.c.h.bf16 %v2511
          %v2562 = vunpack.c.l.bf16 %v2512
          %v2563 = vunpack.c.h.bf16 %v2512
          %v2564 = vunpack.c.l.bf16 %v2513
          %v2565 = vunpack.c.h.bf16 %v2513
          %v2566 = vunpack.c.l.bf16 %v2514
          %v2567 = vunpack.c.h.bf16 %v2514
          %v2568 = vunpack.c.l.bf16 %v2515
          %v2569 = vunpack.c.h.bf16 %v2515
          %v2570 = vunpack.c.l.bf16 %v2516
          %v2571 = vunpack.c.h.bf16 %v2516
          %v2572 = vunpack.c.l.bf16 %v2517
          %v2573 = vunpack.c.h.bf16 %v2517
          %v2574 = vunpack.c.l.bf16 %v2518
          %v2575 = vunpack.c.h.bf16 %v2518
          %v2576 = vunpack.c.l.bf16 %v2519
          %v2577 = vunpack.c.h.bf16 %v2519
          %v2578 = vunpack.c.l.bf16 %v2520
          %v2579 = vunpack.c.h.bf16 %v2520
          %v2580 = vunpack.c.l.bf16 %v2521
          %v2581 = vunpack.c.h.bf16 %v2521
          %v2582 = vunpack.c.l.bf16 %v2522
          %v2583 = vunpack.c.h.bf16 %v2522
          %v2584 = vunpack.c.l.bf16 %v2523
          %v2585 = vunpack.c.h.bf16 %v2523
          %v2586 = vunpack.c.l.bf16 %v2524
          %v2587 = vunpack.c.h.bf16 %v2524
          %v2588 = vunpack.c.l.bf16 %v2525
          %v2589 = vunpack.c.h.bf16 %v2525
          %v2590 = vmul.f32 %v2462, %v2526
          %v2591 = vmul.f32 %v2462, %v2527
          %v2592 = vmul.f32 %v2463, %v2528
          %v2593 = vmul.f32 %v2463, %v2529
          %v2594 = vmul.f32 %v2464, %v2530
          %v2595 = vmul.f32 %v2464, %v2531
          %v2596 = vmul.f32 %v2465, %v2532
          %v2597 = vmul.f32 %v2465, %v2533
          %v2598 = vmul.f32 %v2466, %v2534
          %v2599 = vmul.f32 %v2466, %v2535
          %v2600 = vmul.f32 %v2467, %v2536
          %v2601 = vmul.f32 %v2467, %v2537
          %v2602 = vmul.f32 %v2468, %v2538
          %v2603 = vmul.f32 %v2468, %v2539
          %v2604 = vmul.f32 %v2469, %v2540
          %v2605 = vmul.f32 %v2469, %v2541
          %v2606 = vmul.f32 %v2470, %v2542
          %v2607 = vmul.f32 %v2470, %v2543
          %v2608 = vmul.f32 %v2471, %v2544
          %v2609 = vmul.f32 %v2471, %v2545
          %v2610 = vmul.f32 %v2472, %v2546
          %v2611 = vmul.f32 %v2472, %v2547
          %v2612 = vmul.f32 %v2473, %v2548
          %v2613 = vmul.f32 %v2473, %v2549
          %v2614 = vmul.f32 %v2474, %v2550
          %v2615 = vmul.f32 %v2474, %v2551
          %v2616 = vmul.f32 %v2475, %v2552
          %v2617 = vmul.f32 %v2475, %v2553
          %v2618 = vmul.f32 %v2476, %v2554
          %v2619 = vmul.f32 %v2476, %v2555
          %v2620 = vmul.f32 %v2477, %v2556
          %v2621 = vmul.f32 %v2477, %v2557
          %v2622 = vmul.f32 %v2478, %v2558
          %v2623 = vmul.f32 %v2478, %v2559
          %v2624 = vmul.f32 %v2479, %v2560
          %v2625 = vmul.f32 %v2479, %v2561
          %v2626 = vmul.f32 %v2480, %v2562
          %v2627 = vmul.f32 %v2480, %v2563
          %v2628 = vmul.f32 %v2481, %v2564
          %v2629 = vmul.f32 %v2481, %v2565
          %v2630 = vmul.f32 %v2482, %v2566
          %v2631 = vmul.f32 %v2482, %v2567
          %v2632 = vmul.f32 %v2483, %v2568
          %v2633 = vmul.f32 %v2483, %v2569
          %v2634 = vmul.f32 %v2484, %v2570
          %v2635 = vmul.f32 %v2484, %v2571
          %v2636 = vmul.f32 %v2485, %v2572
          %v2637 = vmul.f32 %v2485, %v2573
          %v2638 = vmul.f32 %v2486, %v2574
          %v2639 = vmul.f32 %v2486, %v2575
          %v2640 = vmul.f32 %v2487, %v2576
          %v2641 = vmul.f32 %v2487, %v2577
          %v2642 = vmul.f32 %v2488, %v2578
          %v2643 = vmul.f32 %v2488, %v2579
          %v2644 = vmul.f32 %v2489, %v2580
          %v2645 = vmul.f32 %v2489, %v2581
          %v2646 = vmul.f32 %v2490, %v2582
          %v2647 = vmul.f32 %v2490, %v2583
          %v2648 = vmul.f32 %v2491, %v2584
          %v2649 = vmul.f32 %v2491, %v2585
          %v2650 = vmul.f32 %v2492, %v2586
          %v2651 = vmul.f32 %v2492, %v2587
          %v2652 = vmul.f32 %v2493, %v2588
          %v2653 = vmul.f32 %v2493, %v2589
          %v2654 = vpack.c.bf16 %v2591, %v2590
          %v2655 = vpack.c.bf16 %v2593, %v2592
          %v2656 = vpack.c.bf16 %v2595, %v2594
          %v2657 = vpack.c.bf16 %v2597, %v2596
          %v2658 = vpack.c.bf16 %v2599, %v2598
          %v2659 = vpack.c.bf16 %v2601, %v2600
          %v2660 = vpack.c.bf16 %v2603, %v2602
          %v2661 = vpack.c.bf16 %v2605, %v2604
          %v2662 = vpack.c.bf16 %v2607, %v2606
          %v2663 = vpack.c.bf16 %v2609, %v2608
          %v2664 = vpack.c.bf16 %v2611, %v2610
          %v2665 = vpack.c.bf16 %v2613, %v2612
          %v2666 = vpack.c.bf16 %v2615, %v2614
          %v2667 = vpack.c.bf16 %v2617, %v2616
          %v2668 = vpack.c.bf16 %v2619, %v2618
          %v2669 = vpack.c.bf16 %v2621, %v2620
          %v2670 = vpack.c.bf16 %v2623, %v2622
          %v2671 = vpack.c.bf16 %v2625, %v2624
          %v2672 = vpack.c.bf16 %v2627, %v2626
          %v2673 = vpack.c.bf16 %v2629, %v2628
          %v2674 = vpack.c.bf16 %v2631, %v2630
          %v2675 = vpack.c.bf16 %v2633, %v2632
          %v2676 = vpack.c.bf16 %v2635, %v2634
          %v2677 = vpack.c.bf16 %v2637, %v2636
          %v2678 = vpack.c.bf16 %v2639, %v2638
          %v2679 = vpack.c.bf16 %v2641, %v2640
          %v2680 = vpack.c.bf16 %v2643, %v2642
          %v2681 = vpack.c.bf16 %v2645, %v2644
          %v2682 = vpack.c.bf16 %v2647, %v2646
          %v2683 = vpack.c.bf16 %v2649, %v2648
          %v2684 = vpack.c.bf16 %v2651, %v2650
          %v2685 = vpack.c.bf16 %v2653, %v2652
          %vm2686 = vcmask 1043456
          %vm2687 = vcmask 785412
          %vm2688 = vmor %vm2687, %vm2686
          %2689 = vst.msk [vmem:[#allocation2] sm:$0xff] %vm2688, %v2654
          %2690 = vst.msk [vmem:[#allocation2 + $0x8] sm:$0xff] %vm2688, %v2655
          %2691 = vst.msk [vmem:[#allocation2 + $0x10] sm:$0xff] %vm2688, %v2656
          %2692 = vst.msk [vmem:[#allocation2 + $0x18] sm:$0xff] %vm2688, %v2657
          %2693 = vst.msk [vmem:[#allocation2 + $0x20] sm:$0xff] %vm2688, %v2658
          %2694 = vst.msk [vmem:[#allocation2 + $0x28] sm:$0xff] %vm2688, %v2659
          %2695 = vst.msk [vmem:[#allocation2 + $0x30] sm:$0xff] %vm2688, %v2660
          %2696 = vst.msk [vmem:[#allocation2 + $0x38] sm:$0xff] %vm2688, %v2661
          %2697 = vst.msk [vmem:[#allocation2 + $0x40] sm:$0xff] %vm2688, %v2662
          %2698 = vst.msk [vmem:[#allocation2 + $0x48] sm:$0xff] %vm2688, %v2663
          %2699 = vst.msk [vmem:[#allocation2 + $0x50] sm:$0xff] %vm2688, %v2664
          %2700 = vst.msk [vmem:[#allocation2 + $0x58] sm:$0xff] %vm2688, %v2665
          %2701 = vst.msk [vmem:[#allocation2 + $0x60] sm:$0xff] %vm2688, %v2666
          %2702 = vst.msk [vmem:[#allocation2 + $0x68] sm:$0xff] %vm2688, %v2667
          %2703 = vst.msk [vmem:[#allocation2 + $0x70] sm:$0xff] %vm2688, %v2668
          %2704 = vst.msk [vmem:[#allocation2 + $0x78] sm:$0xff] %vm2688, %v2669
          %2705 = vst.msk [vmem:[#allocation2 + $0x80] sm:$0xff] %vm2688, %v2670
          %2706 = vst.msk [vmem:[#allocation2 + $0x88] sm:$0xff] %vm2688, %v2671
          %2707 = vst.msk [vmem:[#allocation2 + $0x90] sm:$0xff] %vm2688, %v2672
          %2708 = vst.msk [vmem:[#allocation2 + $0x98] sm:$0xff] %vm2688, %v2673
          %2709 = vst.msk [vmem:[#allocation2 + $0xa0] sm:$0xff] %vm2688, %v2674
          %2710 = vst.msk [vmem:[#allocation2 + $0xa8] sm:$0xff] %vm2688, %v2675
          %2711 = vst.msk [vmem:[#allocation2 + $0xb0] sm:$0xff] %vm2688, %v2676
          %2712 = vst.msk [vmem:[#allocation2 + $0xb8] sm:$0xff] %vm2688, %v2677
          %2713 = vst.msk [vmem:[#allocation2 + $0xc0] sm:$0xff] %vm2688, %v2678
          %2714 = vst.msk [vmem:[#allocation2 + $0xc8] sm:$0xff] %vm2688, %v2679
          %2715 = vst.msk [vmem:[#allocation2 + $0xd0] sm:$0xff] %vm2688, %v2680
          %2716 = vst.msk [vmem:[#allocation2 + $0xd8] sm:$0xff] %vm2688, %v2681
          %2717 = vst.msk [vmem:[#allocation2 + $0xe0] sm:$0xff] %vm2688, %v2682
          %2718 = vst.msk [vmem:[#allocation2 + $0xe8] sm:$0xff] %vm2688, %v2683
          %2719 = vst.msk [vmem:[#allocation2 + $0xf0] sm:$0xff] %vm2688, %v2684
          %2720 = vst.msk [vmem:[#allocation2 + $0xf8] sm:$0xff] %vm2688, %v2685
        $region52: #{my_segmentation_model.1} parent=47 // pred_fallthru
          _
        %v2721 = vld [vmem:[%s315] sm:$0xff]
        %v2722 = vld [vmem:[%s315 + $0x8] sm:$0xff]
        %v2723 = vld [vmem:[%s315 + $0x10] sm:$0xff]
        %v2724 = vld [vmem:[%s315 + $0x18] sm:$0xff]
        %v2725 = vld [vmem:[%s315 + $0x20] sm:$0xff]
        %v2726 = vld [vmem:[%s315 + $0x28] sm:$0xff]
        %v2727 = vld [vmem:[%s315 + $0x30] sm:$0xff]
        %v2728 = vld [vmem:[%s315 + $0x38] sm:$0xff]
        %v2729 = vld [vmem:[%s315 + $0x40] sm:$0xff]
        %v2730 = vld [vmem:[%s315 + $0x48] sm:$0xff]
        %v2731 = vld [vmem:[%s315 + $0x50] sm:$0xff]
        %v2732 = vld [vmem:[%s315 + $0x58] sm:$0xff]
        %v2733 = vld [vmem:[%s315 + $0x60] sm:$0xff]
        %v2734 = vld [vmem:[%s315 + $0x68] sm:$0xff]
        %v2735 = vld [vmem:[#allocation2] sm:$0xff]
        %v2736 = vld [vmem:[#allocation2 + $0x8] sm:$0xff]
        %v2737 = vld [vmem:[#allocation2 + $0x10] sm:$0xff]
        %v2738 = vld [vmem:[#allocation2 + $0x18] sm:$0xff]
        %v2739 = vld [vmem:[#allocation2 + $0x20] sm:$0xff]
        %v2740 = vld [vmem:[#allocation2 + $0x28] sm:$0xff]
        %v2741 = vld [vmem:[#allocation2 + $0x30] sm:$0xff]
        %v2742 = vld [vmem:[#allocation2 + $0x38] sm:$0xff]
        %v2743 = vld [vmem:[#allocation2 + $0x40] sm:$0xff]
        %v2744 = vld [vmem:[#allocation2 + $0x48] sm:$0xff]
        %v2745 = vld [vmem:[#allocation2 + $0x50] sm:$0xff]
        %v2746 = vld [vmem:[#allocation2 + $0x58] sm:$0xff]
        %v2747 = vld [vmem:[#allocation2 + $0x60] sm:$0xff]
        %v2748 = vld [vmem:[#allocation2 + $0x68] sm:$0xff]
        %v2749 = vld [vmem:[#allocation2 + $0x70] sm:$0xff]
        %v2750 = vld [vmem:[#allocation2 + $0x78] sm:$0xff]
        %v2751 = vld [vmem:[#allocation2 + $0x80] sm:$0xff]
        %v2752 = vld [vmem:[#allocation2 + $0x88] sm:$0xff]
        %v2753 = vld [vmem:[#allocation2 + $0x90] sm:$0xff]
        %v2754 = vld [vmem:[#allocation2 + $0x98] sm:$0xff]
        %v2755 = vld [vmem:[#allocation2 + $0xa0] sm:$0xff]
        %v2756 = vld [vmem:[#allocation2 + $0xa8] sm:$0xff]
        %v2757 = vld [vmem:[#allocation2 + $0xb0] sm:$0xff]
        %v2758 = vld [vmem:[#allocation2 + $0xb8] sm:$0xff]
        %v2759 = vld [vmem:[#allocation2 + $0xc0] sm:$0xff]
        %v2760 = vld [vmem:[#allocation2 + $0xc8] sm:$0xff]
        %v2761 = vld [vmem:[#allocation2 + $0xd0] sm:$0xff]
        %v2762 = vld [vmem:[#allocation2 + $0xd8] sm:$0xff]
        %v2763 = vld [vmem:[#allocation2 + $0xe0] sm:$0xff]
        %v2764 = vld [vmem:[#allocation2 + $0xe8] sm:$0xff]
        %v2765 = vld [vmem:[#allocation2 + $0xf0] sm:$0xff]
        %v2766 = vld [vmem:[#allocation2 + $0xf8] sm:$0xff]
        %v2781 = vunpack.c.l.b16 %v2721
        %v2782 = vunpack.c.h.b16 %v2721
        %v2783 = vunpack.c.l.b16 %v2722
        %v2784 = vunpack.c.h.b16 %v2722
        %v2785 = vunpack.c.l.b16 %v2723
        %v2786 = vunpack.c.h.b16 %v2723
        %v2787 = vunpack.c.l.b16 %v2724
        %v2788 = vunpack.c.h.b16 %v2724
        %v2789 = vunpack.c.l.b16 %v2725
        %v2790 = vunpack.c.h.b16 %v2725
        %v2791 = vunpack.c.l.b16 %v2726
        %v2792 = vunpack.c.h.b16 %v2726
        %v2793 = vunpack.c.l.b16 %v2727
        %v2794 = vunpack.c.h.b16 %v2727
        %v2795 = vunpack.c.l.b16 %v2728
        %v2796 = vunpack.c.h.b16 %v2728
        %v2797 = vunpack.c.l.b16 %v2729
        %v2798 = vunpack.c.h.b16 %v2729
        %v2799 = vunpack.c.l.b16 %v2730
        %v2800 = vunpack.c.h.b16 %v2730
        %v2801 = vunpack.c.l.b16 %v2731
        %v2802 = vunpack.c.h.b16 %v2731
        %v2803 = vunpack.c.l.b16 %v2732
        %v2804 = vunpack.c.h.b16 %v2732
        %v2805 = vunpack.c.l.b16 %v2733
        %v2806 = vunpack.c.h.b16 %v2733
        %v2807 = vunpack.c.l.b16 %v2734
        %v2808 = vunpack.c.h.b16 %v2734
        %v2809 = vpack.c.b16 %v2783, %v2781
        %v2810 = vpack.c.b16 %v2784, %v2782
        %v2811 = vpack.c.b16 %v2787, %v2785
        %v2812 = vpack.c.b16 %v2788, %v2786
        %v2813 = vpack.c.b16 %v2791, %v2789
        %v2814 = vpack.c.b16 %v2792, %v2790
        %v2815 = vpack.c.b16 %v2795, %v2793
        %v2816 = vpack.c.b16 %v2796, %v2794
        %v2817 = vpack.c.b16 %v2799, %v2797
        %v2818 = vpack.c.b16 %v2800, %v2798
        %v2819 = vpack.c.b16 %v2803, %v2801
        %v2820 = vpack.c.b16 %v2804, %v2802
        %v2821 = vpack.c.b16 %v2807, %v2805
        %v2822 = vpack.c.b16 %v2808, %v2806
        %v2869 = vunpack.c.l.b16 %v2735
        %v2870 = vunpack.c.h.b16 %v2735
        %v2871 = vunpack.c.l.b16 %v2736
        %v2872 = vunpack.c.h.b16 %v2736
        %v2873 = vunpack.c.l.b16 %v2737
        %v2874 = vunpack.c.h.b16 %v2737
        %v2875 = vunpack.c.l.b16 %v2738
        %v2876 = vunpack.c.h.b16 %v2738
        %v2877 = vunpack.c.l.b16 %v2739
        %v2878 = vunpack.c.h.b16 %v2739
        %v2879 = vunpack.c.l.b16 %v2740
        %v2880 = vunpack.c.h.b16 %v2740
        %v2881 = vunpack.c.l.b16 %v2741
        %v2882 = vunpack.c.h.b16 %v2741
        %v2883 = vunpack.c.l.b16 %v2742
        %v2884 = vunpack.c.h.b16 %v2742
        %v2885 = vunpack.c.l.b16 %v2743
        %v2886 = vunpack.c.h.b16 %v2743
        %v2887 = vunpack.c.l.b16 %v2744
        %v2888 = vunpack.c.h.b16 %v2744
        %v2889 = vunpack.c.l.b16 %v2745
        %v2890 = vunpack.c.h.b16 %v2745
        %v2891 = vunpack.c.l.b16 %v2746
        %v2892 = vunpack.c.h.b16 %v2746
        %v2893 = vunpack.c.l.b16 %v2747
        %v2894 = vunpack.c.h.b16 %v2747
        %v2895 = vunpack.c.l.b16 %v2748
        %v2896 = vunpack.c.h.b16 %v2748
        %v2897 = vunpack.c.l.b16 %v2749
        %v2898 = vunpack.c.h.b16 %v2749
        %v2899 = vunpack.c.l.b16 %v2750
        %v2900 = vunpack.c.h.b16 %v2750
        %v2901 = vunpack.c.l.b16 %v2751
        %v2902 = vunpack.c.h.b16 %v2751
        %v2903 = vunpack.c.l.b16 %v2752
        %v2904 = vunpack.c.h.b16 %v2752
        %v2905 = vunpack.c.l.b16 %v2753
        %v2906 = vunpack.c.h.b16 %v2753
        %v2907 = vunpack.c.l.b16 %v2754
        %v2908 = vunpack.c.h.b16 %v2754
        %v2909 = vunpack.c.l.b16 %v2755
        %v2910 = vunpack.c.h.b16 %v2755
        %v2911 = vunpack.c.l.b16 %v2756
        %v2912 = vunpack.c.h.b16 %v2756
        %v2913 = vunpack.c.l.b16 %v2757
        %v2914 = vunpack.c.h.b16 %v2757
        %v2915 = vunpack.c.l.b16 %v2758
        %v2916 = vunpack.c.h.b16 %v2758
        %v2917 = vunpack.c.l.b16 %v2759
        %v2918 = vunpack.c.h.b16 %v2759
        %v2919 = vunpack.c.l.b16 %v2760
        %v2920 = vunpack.c.h.b16 %v2760
        %v2921 = vunpack.c.l.b16 %v2761
        %v2922 = vunpack.c.h.b16 %v2761
        %v2923 = vunpack.c.l.b16 %v2762
        %v2924 = vunpack.c.h.b16 %v2762
        %v2925 = vunpack.c.l.b16 %v2763
        %v2926 = vunpack.c.h.b16 %v2763
        %v2927 = vunpack.c.l.b16 %v2764
        %v2928 = vunpack.c.h.b16 %v2764
        %v2929 = vunpack.c.l.b16 %v2765
        %v2930 = vunpack.c.h.b16 %v2765
        %v2931 = vunpack.c.l.b16 %v2766
        %v2932 = vunpack.c.h.b16 %v2766
        %v2933 = vpack.c.b16 %v2871, %v2869
        %v2934 = vpack.c.b16 %v2872, %v2870
        %v2935 = vpack.c.b16 %v2875, %v2873
        %v2936 = vpack.c.b16 %v2876, %v2874
        %v2937 = vpack.c.b16 %v2879, %v2877
        %v2938 = vpack.c.b16 %v2880, %v2878
        %v2939 = vpack.c.b16 %v2883, %v2881
        %v2940 = vpack.c.b16 %v2884, %v2882
        %v2941 = vpack.c.b16 %v2887, %v2885
        %v2942 = vpack.c.b16 %v2888, %v2886
        %v2943 = vpack.c.b16 %v2891, %v2889
        %v2944 = vpack.c.b16 %v2892, %v2890
        %v2945 = vpack.c.b16 %v2895, %v2893
        %v2946 = vpack.c.b16 %v2896, %v2894
        %v2947 = vpack.c.b16 %v2899, %v2897
        %v2948 = vpack.c.b16 %v2900, %v2898
        %v2949 = vpack.c.b16 %v2903, %v2901
        %v2950 = vpack.c.b16 %v2904, %v2902
        %v2951 = vpack.c.b16 %v2907, %v2905
        %v2952 = vpack.c.b16 %v2908, %v2906
        %v2953 = vpack.c.b16 %v2911, %v2909
        %v2954 = vpack.c.b16 %v2912, %v2910
        %v2955 = vpack.c.b16 %v2915, %v2913
        %v2956 = vpack.c.b16 %v2916, %v2914
        %v2957 = vpack.c.b16 %v2919, %v2917
        %v2958 = vpack.c.b16 %v2920, %v2918
        %v2959 = vpack.c.b16 %v2923, %v2921
        %v2960 = vpack.c.b16 %v2924, %v2922
        %v2961 = vpack.c.b16 %v2927, %v2925
        %v2962 = vpack.c.b16 %v2928, %v2926
        %v2963 = vpack.c.b16 %v2931, %v2929
        %v2964 = vpack.c.b16 %v2932, %v2930
        %2997 = vmatpush.bf16.msra.mxu0 %v2947
        %2998 = vmatpush.bf16.msra.mxu0 %v2945
        %2999 = vmatpush.bf16.msra.mxu0 %v2943
        %3000 = vmatpush.bf16.msra.mxu0 %v2941
        %3001 = vmatpush.bf16.msra.mxu0 %v2939
        %3002 = vmatpush.bf16.msra.mxu0 %v2937
        %3003 = vmatpush.bf16.msra.mxu0 %v2935
        %3004 = vmatpush.bf16.msra.mxu0 %v2933
        %3005 = vmatmul.bf16.gmra.mxu0 %v2809
        %v3006 = vpop.f32.mrf.mxu0
        %v3007 = vadd.f32 0.0, %v3006
        %v3008 = vpop.f32.mrf.mxu0
        %v3009 = vadd.f32 0.0, %v3008
        %3010 = vmatmul.bf16.gmra.mxu0 %v2811
        %v3011 = vpop.f32.mrf.mxu0
        %v3012 = vadd.f32 0.0, %v3011
        %v3013 = vpop.f32.mrf.mxu0
        %v3014 = vadd.f32 0.0, %v3013
        %3015 = vmatmul.bf16.gmra.mxu0 %v2813
        %v3016 = vpop.f32.mrf.mxu0
        %v3017 = vadd.f32 0.0, %v3016
        %v3018 = vpop.f32.mrf.mxu0
        %v3019 = vadd.f32 0.0, %v3018
        %3020 = vmatmul.bf16.gmra.mxu0 %v2815
        %v3021 = vpop.f32.mrf.mxu0
        %v3022 = vadd.f32 0.0, %v3021
        %v3023 = vpop.f32.mrf.mxu0
        %v3024 = vadd.f32 0.0, %v3023
        %3025 = vmatmul.bf16.gmra.mxu0 %v2817
        %v3026 = vpop.f32.mrf.mxu0
        %v3027 = vadd.f32 0.0, %v3026
        %v3028 = vpop.f32.mrf.mxu0
        %v3029 = vadd.f32 0.0, %v3028
        %3030 = vmatmul.bf16.gmra.mxu0 %v2819
        %v3031 = vpop.f32.mrf.mxu0
        %v3032 = vadd.f32 0.0, %v3031
        %v3033 = vpop.f32.mrf.mxu0
        %v3034 = vadd.f32 0.0, %v3033
        %3035 = vmatmul.bf16.gmra.mxu0 %v2821
        %v3036 = vpop.f32.mrf.mxu0
        %v3037 = vadd.f32 0.0, %v3036
        %v3038 = vpop.f32.mrf.mxu0
        %v3039 = vadd.f32 0.0, %v3038
        %3040 = vdwg.mxu0
        %3041 = vmatpush.bf16.msra.mxu0 %v2963
        %3042 = vmatpush.bf16.msra.mxu0 %v2961
        %3043 = vmatpush.bf16.msra.mxu0 %v2959
        %3044 = vmatpush.bf16.msra.mxu0 %v2957
        %3045 = vmatpush.bf16.msra.mxu0 %v2955
        %3046 = vmatpush.bf16.msra.mxu0 %v2953
        %3047 = vmatpush.bf16.msra.mxu0 %v2951
        %3048 = vmatpush.bf16.msra.mxu0 %v2949
        %3049 = vmatmul.bf16.gmra.mxu0 %v2810
        %v3050 = vpop.f32.mrf.mxu0
        %v3051 = vadd.f32 %v3007, %v3050
        %v3052 = vpop.f32.mrf.mxu0
        %v3053 = vadd.f32 %v3009, %v3052
        %3054 = vmatmul.bf16.gmra.mxu0 %v2812
        %v3055 = vpop.f32.mrf.mxu0
        %v3056 = vadd.f32 %v3012, %v3055
        %v3057 = vpop.f32.mrf.mxu0
        %v3058 = vadd.f32 %v3014, %v3057
        %3059 = vmatmul.bf16.gmra.mxu0 %v2814
        %v3060 = vpop.f32.mrf.mxu0
        %v3061 = vadd.f32 %v3017, %v3060
        %v3062 = vpop.f32.mrf.mxu0
        %v3063 = vadd.f32 %v3019, %v3062
        %3064 = vmatmul.bf16.gmra.mxu0 %v2816
        %v3065 = vpop.f32.mrf.mxu0
        %v3066 = vadd.f32 %v3022, %v3065
        %v3067 = vpop.f32.mrf.mxu0
        %v3068 = vadd.f32 %v3024, %v3067
        %3069 = vmatmul.bf16.gmra.mxu0 %v2818
        %v3070 = vpop.f32.mrf.mxu0
        %v3071 = vadd.f32 %v3027, %v3070
        %v3072 = vpop.f32.mrf.mxu0
        %v3073 = vadd.f32 %v3029, %v3072
        %3074 = vmatmul.bf16.gmra.mxu0 %v2820
        %v3075 = vpop.f32.mrf.mxu0
        %v3076 = vadd.f32 %v3032, %v3075
        %v3077 = vpop.f32.mrf.mxu0
        %v3078 = vadd.f32 %v3034, %v3077
        %3079 = vmatmul.bf16.gmra.mxu0 %v2822
        %v3080 = vpop.f32.mrf.mxu0
        %v3081 = vadd.f32 %v3037, %v3080
        %v3082 = vpop.f32.mrf.mxu0
        %v3083 = vadd.f32 %v3039, %v3082
        %3084 = vdwg.mxu0
        %3085 = vmatpush.bf16.msra.mxu0 %v2948
        %3086 = vmatpush.bf16.msra.mxu0 %v2946
        %3087 = vmatpush.bf16.msra.mxu0 %v2944
        %3088 = vmatpush.bf16.msra.mxu0 %v2942
        %3089 = vmatpush.bf16.msra.mxu0 %v2940
        %3090 = vmatpush.bf16.msra.mxu0 %v2938
        %3091 = vmatpush.bf16.msra.mxu0 %v2936
        %3092 = vmatpush.bf16.msra.mxu0 %v2934
        %3093 = vmatmul.bf16.gmra.mxu0 %v2809
        %v3094 = vpop.f32.mrf.mxu0
        %v3095 = vadd.f32 0.0, %v3094
        %v3096 = vpop.f32.mrf.mxu0
        %v3097 = vadd.f32 0.0, %v3096
        %3098 = vmatmul.bf16.gmra.mxu0 %v2811
        %v3099 = vpop.f32.mrf.mxu0
        %v3100 = vadd.f32 0.0, %v3099
        %v3101 = vpop.f32.mrf.mxu0
        %v3102 = vadd.f32 0.0, %v3101
        %3103 = vmatmul.bf16.gmra.mxu0 %v2813
        %v3104 = vpop.f32.mrf.mxu0
        %v3105 = vadd.f32 0.0, %v3104
        %v3106 = vpop.f32.mrf.mxu0
        %v3107 = vadd.f32 0.0, %v3106
        %3108 = vmatmul.bf16.gmra.mxu0 %v2815
        %v3109 = vpop.f32.mrf.mxu0
        %v3110 = vadd.f32 0.0, %v3109
        %v3111 = vpop.f32.mrf.mxu0
        %v3112 = vadd.f32 0.0, %v3111
        %3113 = vmatmul.bf16.gmra.mxu0 %v2817
        %v3114 = vpop.f32.mrf.mxu0
        %v3115 = vadd.f32 0.0, %v3114
        %v3116 = vpop.f32.mrf.mxu0
        %v3117 = vadd.f32 0.0, %v3116
        %3118 = vmatmul.bf16.gmra.mxu0 %v2819
        %v3119 = vpop.f32.mrf.mxu0
        %v3120 = vadd.f32 0.0, %v3119
        %v3121 = vpop.f32.mrf.mxu0
        %v3122 = vadd.f32 0.0, %v3121
        %3123 = vmatmul.bf16.gmra.mxu0 %v2821
        %v3124 = vpop.f32.mrf.mxu0
        %v3125 = vadd.f32 0.0, %v3124
        %v3126 = vpop.f32.mrf.mxu0
        %v3127 = vadd.f32 0.0, %v3126
        %3128 = vdwg.mxu0
        %3129 = vmatpush.bf16.msra.mxu0 %v2964
        %3130 = vmatpush.bf16.msra.mxu0 %v2962
        %3131 = vmatpush.bf16.msra.mxu0 %v2960
        %3132 = vmatpush.bf16.msra.mxu0 %v2958
        %3133 = vmatpush.bf16.msra.mxu0 %v2956
        %3134 = vmatpush.bf16.msra.mxu0 %v2954
        %3135 = vmatpush.bf16.msra.mxu0 %v2952
        %3136 = vmatpush.bf16.msra.mxu0 %v2950
        %3137 = vmatmul.bf16.gmra.mxu0 %v2810
        %v3138 = vpop.f32.mrf.mxu0
        %v3139 = vadd.f32 %v3095, %v3138
        %v3140 = vpop.f32.mrf.mxu0
        %v3141 = vadd.f32 %v3097, %v3140
        %3142 = vmatmul.bf16.gmra.mxu0 %v2812
        %v3143 = vpop.f32.mrf.mxu0
        %v3144 = vadd.f32 %v3100, %v3143
        %v3145 = vpop.f32.mrf.mxu0
        %v3146 = vadd.f32 %v3102, %v3145
        %3147 = vmatmul.bf16.gmra.mxu0 %v2814
        %v3148 = vpop.f32.mrf.mxu0
        %v3149 = vadd.f32 %v3105, %v3148
        %v3150 = vpop.f32.mrf.mxu0
        %v3151 = vadd.f32 %v3107, %v3150
        %3152 = vmatmul.bf16.gmra.mxu0 %v2816
        %v3153 = vpop.f32.mrf.mxu0
        %v3154 = vadd.f32 %v3110, %v3153
        %v3155 = vpop.f32.mrf.mxu0
        %v3156 = vadd.f32 %v3112, %v3155
        %3157 = vmatmul.bf16.gmra.mxu0 %v2818
        %v3158 = vpop.f32.mrf.mxu0
        %v3159 = vadd.f32 %v3115, %v3158
        %v3160 = vpop.f32.mrf.mxu0
        %v3161 = vadd.f32 %v3117, %v3160
        %3162 = vmatmul.bf16.gmra.mxu0 %v2820
        %v3163 = vpop.f32.mrf.mxu0
        %v3164 = vadd.f32 %v3120, %v3163
        %v3165 = vpop.f32.mrf.mxu0
        %v3166 = vadd.f32 %v3122, %v3165
        %3167 = vmatmul.bf16.gmra.mxu0 %v2822
        %v3168 = vpop.f32.mrf.mxu0
        %v3169 = vadd.f32 %v3125, %v3168
        %v3170 = vpop.f32.mrf.mxu0
        %v3171 = vadd.f32 %v3127, %v3170
        %3172 = vdwg.mxu0
        %3173 = vst [vmem:[%s304] sm:$0xff] %v3051
        %vm3174 = vcmask 785408
        %3175 = vst.msk [vmem:[%s304 + $0x8] sm:$0xff] %vm3174, %v3139
        %3176 = vst [vmem:[%s304 + $0x10] sm:$0xff] %v3053
        %3177 = vst.msk [vmem:[%s304 + $0x18] sm:$0xff] %vm3174, %v3141
        %3178 = vst [vmem:[%s304 + $0x20] sm:$0xff] %v3056
        %3179 = vst.msk [vmem:[%s304 + $0x28] sm:$0xff] %vm3174, %v3144
        %3180 = vst [vmem:[%s304 + $0x30] sm:$0xff] %v3058
        %3181 = vst.msk [vmem:[%s304 + $0x38] sm:$0xff] %vm3174, %v3146
        %3182 = vst [vmem:[%s304 + $0x40] sm:$0xff] %v3061
        %3183 = vst.msk [vmem:[%s304 + $0x48] sm:$0xff] %vm3174, %v3149
        %3184 = vst [vmem:[%s304 + $0x50] sm:$0xff] %v3063
        %3185 = vst.msk [vmem:[%s304 + $0x58] sm:$0xff] %vm3174, %v3151
        %3186 = vst [vmem:[%s304 + $0x60] sm:$0xff] %v3066
        %3187 = vst.msk [vmem:[%s304 + $0x68] sm:$0xff] %vm3174, %v3154
        %3188 = vst [vmem:[%s304 + $0x70] sm:$0xff] %v3068
        %3189 = vst.msk [vmem:[%s304 + $0x78] sm:$0xff] %vm3174, %v3156
        %3190 = vst [vmem:[%s304 + $0x80] sm:$0xff] %v3071
        %3191 = vst.msk [vmem:[%s304 + $0x88] sm:$0xff] %vm3174, %v3159
        %3192 = vst [vmem:[%s304 + $0x90] sm:$0xff] %v3073
        %3193 = vst.msk [vmem:[%s304 + $0x98] sm:$0xff] %vm3174, %v3161
        %3194 = vst [vmem:[%s304 + $0xa0] sm:$0xff] %v3076
        %3195 = vst.msk [vmem:[%s304 + $0xa8] sm:$0xff] %vm3174, %v3164
        %3196 = vst [vmem:[%s304 + $0xb0] sm:$0xff] %v3078
        %3197 = vst.msk [vmem:[%s304 + $0xb8] sm:$0xff] %vm3174, %v3166
        %3198 = vst [vmem:[%s304 + $0xc0] sm:$0xff] %v3081
        %3199 = vst.msk [vmem:[%s304 + $0xc8] sm:$0xff] %vm3174, %v3169
        %3200 = vst [vmem:[%s304 + $0xd0] sm:$0xff] %v3083
        %3201 = vst.msk [vmem:[%s304 + $0xd8] sm:$0xff] %vm3174, %v3171
        %s3202 = sand.u32 %s201, 1
        %s3203 = scalar_lea.sflag [#allocation5], %s3202
        %s3204 = sand.u32 %s201, 1
        %s3205 = smul.addr %s3204, 224
        %s3206 = scalar_lea.vmem [#allocation4], %s3205
        // Predicated region
        $region53: #{my_segmentation_model.1} parent=47 // pred_check
          %p3207 = pneg %p211
        $region54: #{my_segmentation_model.1} parent=47 // pred_check_branch
          %3209 = sbr.rel (%p3207) target = $region56
        $region55: #{my_segmentation_model.1} parent=47 // pred_region
          %s3210 = smul.u32 14, %s27
          %3212 = vsyncadd %s3203, 0
          %s3213 = smul.addr %s3210, 2
          %s3214 = smul.addr %s26, 56
          %s3215 = sadd.s32 %s3213, %s3214
          %s3216 = smul.addr %s3215, 8
          %s3217 = scalar_lea.hbm %s7, %s3216
          %s3218 = sshll.u32 %s3206, 4
          %s3219 = int_to_ptr.vmem [resolvable:$true] %s3218
          %s3220 = sshll.u32 %s3217, 4
          %s3221 = int_to_ptr.hbm [resolvable:$true] %s3220
          %3226 = dma.vmem_to_hbm [thread:$0]  %s3219, 3584, %s3221, %s3203, 256, 256, 16
        $region56: #{my_segmentation_model.1} parent=47 // pred_fallthru
          _
      $region48: #{my_segmentation_model.1} parent=5 // pred_fallthru
        _
      %p3227 = scmp.le.s32.totalorder 2, %s17
      // Predicated region
      $region57: #{my_segmentation_model.1} parent=5 // pred_check
        %p3228 = pneg %p3227
      $region58: #{my_segmentation_model.1} parent=5 // pred_check_branch
        %3230 = sbr.rel (%p3228) target = $region60
      $region59: #{my_segmentation_model.1} parent=5 // pred_region
        %s3231 = ssub.s32 %s17, 2
        // Predicated region
        $region61: #{my_segmentation_model.1} parent=59 // pred_check
          %p3232 = pneg %p217
        $region62: #{my_segmentation_model.1} parent=59 // pred_check_branch
          %3234 = sbr.rel (%p3232) target = $region64
        $region63: #{my_segmentation_model.1} parent=59 // pred_region
          %s3235 = sand.u32 %s202, 1
          %s3236 = scalar_lea.sflag [#allocation5], %s3235
          %s3237 = sand.u32 %s202, 1
          %s3238 = smul.addr %s3237, 224
          %s3239 = scalar_lea.vmem [#allocation4], %s3238
          %3241 = dma.done %s3236, 3584
        $region64: #{my_segmentation_model.1} parent=59 // pred_fallthru
          _
      $region60: #{my_segmentation_model.1} parent=5 // pred_fallthru
        _
    $region6: #{my_segmentation_model.1} parent=1 // loop_footer
      %s21 = sadd.s32 1, %s17
    $region7: #{my_segmentation_model.1} parent=1 // loop_footer_branch
      %16 = sbr.rel target = $region3
    $region8: #{my_segmentation_model.1} parent=1 // loop_exit
      _
    %3242 = vsyncpa [#allocation5], 1
    %s3243 = scalar_lea.sflag [#allocation5], 1
    %3244 = vsyncpa %s3243, 1

</llo_original>
